<compile_context>
chip_gen: v5e
topology: v5e:2x2
jax: 0.10.0
libtpu: 0.0.40
codegen_flags: <defaults>
</compile_context>

<pallas_src>
import functools

import jax
import jax.numpy as jnp
from jax import lax
from jax.experimental import pallas as pl
from jax.experimental.pallas import tpu as pltpu

EPS = 1e-5  # nn.LayerNorm default


def _layernorm(x, gamma, beta):
    mu = jnp.mean(x, axis=-1, keepdims=True)
    var = jnp.mean((x - mu) ** 2, axis=-1, keepdims=True)
    return (x - mu) * lax.rsqrt(var + EPS) * gamma + beta


# ---------------------------------------------------------------------------
# Fully fused GPT forward kernel: all layers + final LN + lm_head
# ---------------------------------------------------------------------------
def gpt_kernel(x_ref, ln1g_ref, ln1b_ref, wqkv_ref, wproj_ref, bproj_ref,
               ln2g_ref, ln2b_ref, w1_ref, b1_ref, w2_ref, b2_ref,
               lnfg_ref, lnfb_ref, wlm_ref, blm_ref, out_ref,
               *, n_heads, n_layers, b_blk, seq):
    f32, bf = jnp.float32, jnp.bfloat16
    x = x_ref[...]                       # (M, C) resident activation, M = b_blk * seq
    M, C = x.shape
    T = seq
    hs = C // n_heads
    # NOTE: the torch reference scales by n_embeds**-0.5 (C), not head_size**-0.5.
    scale = C ** (-0.5)

    # Causal mask hoisted out of the layer loop (JAX does not CSE broadcast/iota).
    row = lax.broadcasted_iota(jnp.int32, (T, T), 0)
    col = lax.broadcasted_iota(jnp.int32, (T, T), 1)
    causal = (col <= row)[None, :, :]    # (1, T, T), broadcasts over heads
    neg = jnp.float32(-1e30)             # finite "-inf": exp underflows to exactly 0

    for l in range(n_layers):            # static layer loop; weights live in VMEM
        # --- multi-head causal self-attention on ln1(x) ---
        h = _layernorm(x, ln1g_ref[l], ln1b_ref[l])
        qkv = jnp.dot(h.astype(bf), wqkv_ref[l],
                      preferred_element_type=f32)            # (M, 3C) one fused matmul
        wp = wproj_ref[l]                                     # (H, hs, C) bf16
        sa_parts = []
        for b in range(b_blk):                                # static, b_blk is tiny
            qkv_b = qkv[b * T:(b + 1) * T, :]                 # (T, 3C)
            qh = jnp.stack([qkv_b[:, hd * hs:(hd + 1) * hs]
                            for hd in range(n_heads)], axis=0)             # (H, T, hs)
            kh = jnp.stack([qkv_b[:, C + hd * hs:C + (hd + 1) * hs]
                            for hd in range(n_heads)], axis=0)
            vh = jnp.stack([qkv_b[:, 2 * C + hd * hs:2 * C + (hd + 1) * hs]
                            for hd in range(n_heads)], axis=0)
            # Head-batched contractions (single einsum instead of n_heads dots).
            wei = jnp.einsum('htd,hsd->hts', qh, kh,
                             preferred_element_type=f32) * scale           # (H, T, T)
            wei = jnp.where(causal, wei, neg)
            wei = wei - jnp.max(wei, axis=-1, keepdims=True)
            p = jnp.exp(wei)
            p = p / jnp.sum(p, axis=-1, keepdims=True)
            o = jnp.einsum('hts,hsd->htd', p, vh,
                           preferred_element_type=f32)                     # (H, T, hs)
            # Head-batched output projection; summing over heads yields the packed
            # (T, C) result directly -- no lane-axis concat of hs-wide slices.
            op = jnp.einsum('htd,hdc->htc', o.astype(bf), wp,
                            preferred_element_type=f32)                    # (H, T, C)
            sa_parts.append(jnp.sum(op, axis=0))                           # (T, C)
        sa = sa_parts[0] if b_blk == 1 else jnp.concatenate(sa_parts, axis=0)
        x = x + sa + bproj_ref[l]

        # --- feed-forward on ln2(x) ---
        h2 = _layernorm(x, ln2g_ref[l], ln2b_ref[l])
        f = jnp.dot(h2.astype(bf), w1_ref[l], preferred_element_type=f32) + b1_ref[l]
        f = jnp.maximum(f, 0.0)
        x = x + jnp.dot(f.astype(bf), w2_ref[l], preferred_element_type=f32) + b2_ref[l]

    # --- final layernorm + lm_head (vocab padded to a lane-dense multiple of 128) ---
    # TODO(synk): at real GPT sizes, tile the lm_head over vocab with a grid axis so
    # wlm fits v7x's 64 MiB VMEM; at this toy size a single (C, 128) block is optimal.
    hf = _layernorm(x, lnfg_ref[...], lnfb_ref[...])
    out_ref[...] = jnp.dot(hf.astype(bf), wlm_ref[...],
                           preferred_element_type=f32) + blm_ref[...]


# ---------------------------------------------------------------------------
# Wrapper
# ---------------------------------------------------------------------------
def _param_spec(p):
    nd = p.ndim
    return pl.BlockSpec(p.shape, lambda nb, _nd=nd: (0,) * _nd)


def gpt_forward(idx, params, n_heads):
    B, T = idx.shape
    C = params["tok_emb"].shape[1]
    L = params["wqkv"].shape[0]
    vocab = params["wlm"].shape[1]
    Vp = max(128, -(-vocab // 128) * 128)     # lane-dense logits slab

    # Embedding gathers are plain-JAX glue (no clean Pallas gather at this scale).
    tok = jnp.take(params["tok_emb"], idx, axis=0)                  # (B, T, C)
    x = (tok + params["pos_emb"][:T][None, :, :]).astype(jnp.float32)
    x_flat = x.reshape(B * T, C)                                    # M = B*T rows

    # Pad lm_head to a multiple of 128 lanes (wrapper-side layout plumbing).
    wlm_p = jnp.pad(params["wlm"], ((0, 0), (0, Vp - vocab)))
    blm_p = jnp.pad(params["blm"], ((0, 0), (0, Vp - vocab)))

    # >= 2 parallel grid steps over batch so v7x's two TensorCores are both used.
    nb = 2 if (B >= 2 and B % 2 == 0) else 1
    b_blk = B // nb
    M = b_blk * T

    args = (x_flat, params["ln1g"], params["ln1b"], params["wqkv"],
            params["wproj"], params["bproj"], params["ln2g"], params["ln2b"],
            params["w1"], params["b1"], params["w2"], params["b2"],
            params["lnfg"], params["lnfb"], wlm_p, blm_p)

    in_specs = [pl.BlockSpec((M, C), lambda i: (i, 0))]
    in_specs += [_param_spec(a) for a in args[1:]]

    out = pl.pallas_call(
        functools.partial(gpt_kernel, n_heads=n_heads, n_layers=L,
                          b_blk=b_blk, seq=T),
        out_shape=jax.ShapeDtypeStruct((B * T, Vp), jnp.float32),
        grid=(nb,),
        in_specs=in_specs,
        out_specs=pl.BlockSpec((M, Vp), lambda i: (i, 0)),
        compiler_params=pltpu.CompilerParams(
            dimension_semantics=("parallel",)),
    )(*args)
    return out[:, :vocab].reshape(B, T, vocab)


# ---------------------------------------------------------------------------
# Parameter init (deterministic, synthetic); MXU weights in bf16, rest f32.
# ---------------------------------------------------------------------------
def init_params(key, vocab_size, n_embeds, block_size, n_heads, n_layers):
    C = n_embeds
    hs = C // n_heads
    ki = iter(jax.random.split(key, 9 * n_layers + 8))
    f32, bf = jnp.float32, jnp.bfloat16

    def rnd(shape, dtype):
        return (0.02 * jax.random.normal(next(ki), shape, f32)).astype(dtype)

    wqkv, wproj, w1, w2 = [], [], [], []
    ln1g, ln1b, ln2g, ln2b, bproj, b1, b2 = [], [], [], [], [], [], []
    for _ in range(n_layers):
        wqkv.append(jnp.concatenate(
            [rnd((C, C), bf), rnd((C, C), bf), rnd((C, C), bf)], axis=1))  # (C, 3C)
        wproj.append(rnd((C, C), bf).reshape(n_heads, hs, C))              # (H, hs, C)
        w1.append(rnd((C, 4 * C), bf))
        w2.append(rnd((4 * C, C), bf))
        ln1g.append(jnp.ones((1, C), f32)); ln1b.append(jnp.zeros((1, C), f32))
        ln2g.append(jnp.ones((1, C), f32)); ln2b.append(jnp.zeros((1, C), f32))
        bproj.append(rnd((1, C), f32))
        b1.append(rnd((1, 4 * C), f32))
        b2.append(rnd((1, C), f32))

    return {
        "tok_emb": rnd((vocab_size, C), f32),
        "pos_emb": rnd((block_size, C), f32),
        "ln1g": jnp.stack(ln1g), "ln1b": jnp.stack(ln1b),
        "wqkv": jnp.stack(wqkv), "wproj": jnp.stack(wproj), "bproj": jnp.stack(bproj),
        "ln2g": jnp.stack(ln2g), "ln2b": jnp.stack(ln2b),
        "w1": jnp.stack(w1), "b1": jnp.stack(b1),
        "w2": jnp.stack(w2), "b2": jnp.stack(b2),
        "lnfg": jnp.ones((1, C), f32), "lnfb": jnp.zeros((1, C), f32),
        "wlm": rnd((C, vocab_size), bf),
        "blm": rnd((1, vocab_size), f32),
    }


# ---------------------------------------------------------------------------
# Pure-JAX reference (same math / same bf16 matmul inputs, f32 accumulation)
# ---------------------------------------------------------------------------
def gpt_forward_ref(idx, params, n_heads):
    f32, bf = jnp.float32, jnp.bfloat16
    B, T = idx.shape
    tok = jnp.take(params["tok_emb"], idx, axis=0)
    x = (tok + params["pos_emb"][:T][None, :, :]).astype(f32)
    C = x.shape[-1]
    hs = C // n_heads
    scale = C ** (-0.5)
    causal = jnp.tril(jnp.ones((T, T), bool))
    L = params["wqkv"].shape[0]
    for l in range(L):
        h = _layernorm(x, params["ln1g"][l], params["ln1b"][l])
        qkv = jnp.einsum('btc,cd->btd', h.astype(bf), params["wqkv"][l],
                         preferred_element_type=f32)
        q, k, v = qkv[..., :C], qkv[..., C:2 * C], qkv[..., 2 * C:]
        outs = []
        for hd in range(n_heads):
            qh = q[..., hd * hs:(hd + 1) * hs]
            kh = k[..., hd * hs:(hd + 1) * hs]
            vh = v[..., hd * hs:(hd + 1) * hs]
            wei = jnp.einsum('btd,bsd->bts', qh, kh,
                             preferred_element_type=f32) * scale
            wei = jnp.where(causal, wei, jnp.float32(-1e30))
            wei = wei - jnp.max(wei, axis=-1, keepdims=True)
            p = jnp.exp(wei)
            p = p / jnp.sum(p, axis=-1, keepdims=True)
            outs.append(jnp.einsum('bts,bsd->btd', p, vh,
                                   preferred_element_type=f32))
        sa = jnp.concatenate(outs, axis=-1)
        wp = params["wproj"][l].reshape(C, C)
        sa = jnp.einsum('btc,cd->btd', sa.astype(bf), wp,
                        preferred_element_type=f32) + params["bproj"][l]
        x = x + sa
        h2 = _layernorm(x, params["ln2g"][l], params["ln2b"][l])
        f = jnp.einsum('btc,cd->btd', h2.astype(bf), params["w1"][l],
                       preferred_element_type=f32) + params["b1"][l]
        f = jnp.maximum(f, 0.0)
        x = x + jnp.einsum('btc,cd->btd', f.astype(bf), params["w2"][l],
                           preferred_element_type=f32) + params["b2"][l]
    hf = _layernorm(x, params["lnfg"], params["lnfb"])
    return jnp.einsum('btc,cv->btv', hf.astype(bf), params["wlm"],
                      preferred_element_type=f32) + params["blm"]


if __name__ == "__main__":
    # Small config consistent with the module's constructor.
    vocab_size, n_embeds, block_size, n_heads, n_layers = 64, 32, 8, 4, 2
    B, T = 2, 8

    key = jax.random.PRNGKey(0)
    pkey, ikey = jax.random.split(key)
    params = init_params(pkey, vocab_size, n_embeds, block_size, n_heads, n_layers)
    idx = jax.random.randint(ikey, (B, T), 0, vocab_size, dtype=jnp.int32)

    fwd = jax.jit(lambda i, p: gpt_forward(i, p, n_heads))
    logits = jax.block_until_ready(fwd(idx, params))
    assert logits.shape == (B, T, vocab_size), logits.shape

    ref = gpt_forward_ref(idx, params, n_heads)
    max_err = float(jnp.max(jnp.abs(logits - ref)))
    assert jnp.allclose(logits, ref, atol=1e-3, rtol=1e-3), max_err

    # TODO(synk): cross-entropy loss (targets path) and generate() sampling loop are
    # host/XLA-level control flow and are not kernelized here.
    print("KERNEL_OK")
</pallas_src>

<mosaic_0001>
module attributes {stable_mosaic.version = 11 : i64} {
  func.func @gpt_kernel(%arg0: i32, %arg1: memref<8x32xf32, #tpu.memory_space<vmem>>, %arg2: memref<2x1x32xf32, #tpu.memory_space<vmem>>, %arg3: memref<2x1x32xf32, #tpu.memory_space<vmem>>, %arg4: memref<2x32x96xbf16, #tpu.memory_space<vmem>>, %arg5: memref<2x4x8x32xbf16, #tpu.memory_space<vmem>>, %arg6: memref<2x1x32xf32, #tpu.memory_space<vmem>>, %arg7: memref<2x1x32xf32, #tpu.memory_space<vmem>>, %arg8: memref<2x1x32xf32, #tpu.memory_space<vmem>>, %arg9: memref<2x32x128xbf16, #tpu.memory_space<vmem>>, %arg10: memref<2x1x128xf32, #tpu.memory_space<vmem>>, %arg11: memref<2x128x32xbf16, #tpu.memory_space<vmem>>, %arg12: memref<2x1x32xf32, #tpu.memory_space<vmem>>, %arg13: memref<1x32xf32, #tpu.memory_space<vmem>>, %arg14: memref<1x32xf32, #tpu.memory_space<vmem>>, %arg15: memref<32x128xbf16, #tpu.memory_space<vmem>>, %arg16: memref<1x128xf32, #tpu.memory_space<vmem>>, %arg17: memref<8x128xf32, #tpu.memory_space<vmem>>) attributes {dimension_semantics = [#tpu.dimension_semantics<parallel>], iteration_bounds = array<i64: 2>, scalar_prefetch = 0 : i64, scratch_operands = 0 : i64, tpu.core_type = #tpu.core_type<tc>, window_params = [{transform_indices = @transform_0, window_bounds = array<i64: 8, 32>}, {pipeline_mode = #tpu.pipeline_mode<synchronous>, transform_indices = @transform_1, window_bounds = array<i64: 2, 1, 32>}, {pipeline_mode = #tpu.pipeline_mode<synchronous>, transform_indices = @transform_2, window_bounds = array<i64: 2, 1, 32>}, {pipeline_mode = #tpu.pipeline_mode<synchronous>, transform_indices = @transform_3, window_bounds = array<i64: 2, 32, 96>}, {pipeline_mode = #tpu.pipeline_mode<synchronous>, transform_indices = @transform_4, window_bounds = array<i64: 2, 4, 8, 32>}, {pipeline_mode = #tpu.pipeline_mode<synchronous>, transform_indices = @transform_5, window_bounds = array<i64: 2, 1, 32>}, {pipeline_mode = #tpu.pipeline_mode<synchronous>, transform_indices = @transform_6, window_bounds = array<i64: 2, 1, 32>}, {pipeline_mode = #tpu.pipeline_mode<synchronous>, transform_indices = @transform_7, window_bounds = array<i64: 2, 1, 32>}, {pipeline_mode = #tpu.pipeline_mode<synchronous>, transform_indices = @transform_8, window_bounds = array<i64: 2, 32, 128>}, {pipeline_mode = #tpu.pipeline_mode<synchronous>, transform_indices = @transform_9, window_bounds = array<i64: 2, 1, 128>}, {pipeline_mode = #tpu.pipeline_mode<synchronous>, transform_indices = @transform_10, window_bounds = array<i64: 2, 128, 32>}, {pipeline_mode = #tpu.pipeline_mode<synchronous>, transform_indices = @transform_11, window_bounds = array<i64: 2, 1, 32>}, {pipeline_mode = #tpu.pipeline_mode<synchronous>, transform_indices = @transform_12, window_bounds = array<i64: 1, 32>}, {pipeline_mode = #tpu.pipeline_mode<synchronous>, transform_indices = @transform_13, window_bounds = array<i64: 1, 32>}, {pipeline_mode = #tpu.pipeline_mode<synchronous>, transform_indices = @transform_14, window_bounds = array<i64: 32, 128>}, {pipeline_mode = #tpu.pipeline_mode<synchronous>, transform_indices = @transform_15, window_bounds = array<i64: 1, 128>}, {transform_indices = @transform_16, window_bounds = array<i64: 8, 128>}]} {
    %c0 = arith.constant 0 : index
    %c0_0 = arith.constant 0 : index
    %0 = vector.load %arg1[%c0, %c0_0] : memref<8x32xf32, #tpu.memory_space<vmem>>, vector<8x32xf32>
    %1 = tpu.iota {dimensions = array<i32: 0>} : vector<8x8xi32>
    %2 = tpu.iota {dimensions = array<i32: 1>} : vector<8x8xi32>
    %3 = arith.cmpi sle, %2, %1 : vector<8x8xi32>
    %4 = vector.shape_cast %3 : vector<8x8xi1> to vector<1x8x8xi1>
    %c0_1 = arith.constant 0 : index
    %c0_2 = arith.constant 0 : index
    %c0_3 = arith.constant 0 : index
    %5 = vector.load %arg2[%c0_1, %c0_2, %c0_3] : memref<2x1x32xf32, #tpu.memory_space<vmem>>, vector<1x1x32xf32>
    %6 = vector.shape_cast %5 : vector<1x1x32xf32> to vector<1x32xf32>
    %c0_4 = arith.constant 0 : index
    %c0_5 = arith.constant 0 : index
    %c0_6 = arith.constant 0 : index
    %7 = vector.load %arg3[%c0_4, %c0_5, %c0_6] : memref<2x1x32xf32, #tpu.memory_space<vmem>>, vector<1x1x32xf32>
    %8 = vector.shape_cast %7 : vector<1x1x32xf32> to vector<1x32xf32>
    %cst = arith.constant dense<0.000000e+00> : vector<8xf32>
    %9 = vector.multi_reduction <add>, %0, %cst [1] : vector<8x32xf32> to vector<8xf32>
    %10 = vector.shape_cast %9 : vector<8xf32> to vector<8x1xf32>
    %cst_7 = arith.constant 3.200000e+01 : f32
    %11 = vector.broadcast %cst_7 : f32 to vector<8x1xf32>
    %12 = arith.divf %10, %11 : vector<8x1xf32>
    %13 = vector.broadcast %12 : vector<8x1xf32> to vector<8x32xf32>
    %14 = arith.subf %0, %13 : vector<8x32xf32>
    %15 = arith.mulf %14, %14 : vector<8x32xf32>
    %cst_8 = arith.constant dense<0.000000e+00> : vector<8xf32>
    %16 = vector.multi_reduction <add>, %15, %cst_8 [1] : vector<8x32xf32> to vector<8xf32>
    %17 = vector.shape_cast %16 : vector<8xf32> to vector<8x1xf32>
    %cst_9 = arith.constant 3.200000e+01 : f32
    %18 = vector.broadcast %cst_9 : f32 to vector<8x1xf32>
    %19 = arith.divf %17, %18 : vector<8x1xf32>
    %20 = vector.broadcast %12 : vector<8x1xf32> to vector<8x32xf32>
    %21 = arith.subf %0, %20 : vector<8x32xf32>
    %cst_10 = arith.constant 9.99999974E-6 : f32
    %22 = vector.broadcast %cst_10 : f32 to vector<8x1xf32>
    %23 = arith.addf %19, %22 : vector<8x1xf32>
    %24 = math.rsqrt %23 : vector<8x1xf32>
    %25 = vector.broadcast %24 : vector<8x1xf32> to vector<8x32xf32>
    %26 = arith.mulf %21, %25 : vector<8x32xf32>
    %27 = vector.broadcast %6 : vector<1x32xf32> to vector<8x32xf32>
    %28 = arith.mulf %26, %27 : vector<8x32xf32>
    %29 = vector.broadcast %8 : vector<1x32xf32> to vector<8x32xf32>
    %30 = arith.addf %28, %29 : vector<8x32xf32>
    %31 = arith.truncf %30 : vector<8x32xf32> to vector<8x32xbf16>
    %c0_11 = arith.constant 0 : index
    %c0_12 = arith.constant 0 : index
    %c0_13 = arith.constant 0 : index
    %32 = vector.load %arg4[%c0_11, %c0_12, %c0_13] : memref<2x32x96xbf16, #tpu.memory_space<vmem>>, vector<1x32x96xbf16>
    %33 = vector.shape_cast %32 : vector<1x32x96xbf16> to vector<32x96xbf16>
    %cst_14 = arith.constant dense<0.000000e+00> : vector<8x96xf32>
    %34 = tpu.matmul %31, %33, %cst_14 {dimension_numbers = #tpu.dot_dimension_numbers<[1], [0], [0], [1], [0, 0, 1, 1], [], []>} : vector<8x32xbf16>, vector<32x96xbf16>, vector<8x96xf32> -> vector<8x96xf32>
    %c0_15 = arith.constant 0 : index
    %c0_16 = arith.constant 0 : index
    %c0_17 = arith.constant 0 : index
    %c0_18 = arith.constant 0 : index
    %35 = vector.load %arg5[%c0_15, %c0_16, %c0_17, %c0_18] : memref<2x4x8x32xbf16, #tpu.memory_space<vmem>>, vector<1x4x8x32xbf16>
    %36 = vector.shape_cast %35 : vector<1x4x8x32xbf16> to vector<4x8x32xbf16>
    %37 = vector.extract_strided_slice %34 {offsets = [0, 0], sizes = [8, 8], strides = [1, 1]} : vector<8x96xf32> to vector<8x8xf32>
    %38 = vector.extract_strided_slice %34 {offsets = [0, 8], sizes = [8, 8], strides = [1, 1]} : vector<8x96xf32> to vector<8x8xf32>
    %39 = vector.extract_strided_slice %34 {offsets = [0, 16], sizes = [8, 8], strides = [1, 1]} : vector<8x96xf32> to vector<8x8xf32>
    %40 = vector.extract_strided_slice %34 {offsets = [0, 24], sizes = [8, 8], strides = [1, 1]} : vector<8x96xf32> to vector<8x8xf32>
    %41 = vector.shape_cast %37 : vector<8x8xf32> to vector<1x8x8xf32>
    %42 = vector.shape_cast %38 : vector<8x8xf32> to vector<1x8x8xf32>
    %43 = vector.shape_cast %39 : vector<8x8xf32> to vector<1x8x8xf32>
    %44 = vector.shape_cast %40 : vector<8x8xf32> to vector<1x8x8xf32>
    %45 = tpu.concatenate %41, %42, %43, %44 in 0 : vector<1x8x8xf32>, vector<1x8x8xf32>, vector<1x8x8xf32>, vector<1x8x8xf32> -> vector<4x8x8xf32>
    %46 = vector.extract_strided_slice %34 {offsets = [0, 32], sizes = [8, 8], strides = [1, 1]} : vector<8x96xf32> to vector<8x8xf32>
    %47 = vector.extract_strided_slice %34 {offsets = [0, 40], sizes = [8, 8], strides = [1, 1]} : vector<8x96xf32> to vector<8x8xf32>
    %48 = vector.extract_strided_slice %34 {offsets = [0, 48], sizes = [8, 8], strides = [1, 1]} : vector<8x96xf32> to vector<8x8xf32>
    %49 = vector.extract_strided_slice %34 {offsets = [0, 56], sizes = [8, 8], strides = [1, 1]} : vector<8x96xf32> to vector<8x8xf32>
    %50 = vector.shape_cast %46 : vector<8x8xf32> to vector<1x8x8xf32>
    %51 = vector.shape_cast %47 : vector<8x8xf32> to vector<1x8x8xf32>
    %52 = vector.shape_cast %48 : vector<8x8xf32> to vector<1x8x8xf32>
    %53 = vector.shape_cast %49 : vector<8x8xf32> to vector<1x8x8xf32>
    %54 = tpu.concatenate %50, %51, %52, %53 in 0 : vector<1x8x8xf32>, vector<1x8x8xf32>, vector<1x8x8xf32>, vector<1x8x8xf32> -> vector<4x8x8xf32>
    %55 = vector.extract_strided_slice %34 {offsets = [0, 64], sizes = [8, 8], strides = [1, 1]} : vector<8x96xf32> to vector<8x8xf32>
    %56 = vector.extract_strided_slice %34 {offsets = [0, 72], sizes = [8, 8], strides = [1, 1]} : vector<8x96xf32> to vector<8x8xf32>
    %57 = vector.extract_strided_slice %34 {offsets = [0, 80], sizes = [8, 8], strides = [1, 1]} : vector<8x96xf32> to vector<8x8xf32>
    %58 = vector.extract_strided_slice %34 {offsets = [0, 88], sizes = [8, 8], strides = [1, 1]} : vector<8x96xf32> to vector<8x8xf32>
    %59 = vector.shape_cast %55 : vector<8x8xf32> to vector<1x8x8xf32>
    %60 = vector.shape_cast %56 : vector<8x8xf32> to vector<1x8x8xf32>
    %61 = vector.shape_cast %57 : vector<8x8xf32> to vector<1x8x8xf32>
    %62 = vector.shape_cast %58 : vector<8x8xf32> to vector<1x8x8xf32>
    %63 = tpu.concatenate %59, %60, %61, %62 in 0 : vector<1x8x8xf32>, vector<1x8x8xf32>, vector<1x8x8xf32>, vector<1x8x8xf32> -> vector<4x8x8xf32>
    "tpu.trace_start"() <{level = 10 : i32, message = "htd,hsd->hts"}> : () -> ()
    %cst_19 = arith.constant dense<0.000000e+00> : vector<4x8x8xf32>
    %64 = tpu.matmul %45, %54, %cst_19 {dimension_numbers = #tpu.dot_dimension_numbers<[2], [2], [1], [1], [0, 0, 0, 1, 1, 1], [0], [0]>} : vector<4x8x8xf32>, vector<4x8x8xf32>, vector<4x8x8xf32> -> vector<4x8x8xf32>
    "tpu.trace_stop"() : () -> ()
    %cst_20 = arith.constant 0.176776692 : f32
    %65 = vector.broadcast %cst_20 : f32 to vector<4x8x8xf32>
    %66 = arith.mulf %64, %65 : vector<4x8x8xf32>
    %cst_21 = arith.constant -1.000000e+30 : f32
    %67 = vector.shape_cast %4 : vector<1x8x8xi1> to vector<1x8x8xi1>
    %68 = vector.broadcast %67 : vector<1x8x8xi1> to vector<4x8x8xi1>
    %69 = vector.broadcast %cst_21 : f32 to vector<4x8x8xf32>
    %70 = arith.select %68, %66, %69 : vector<4x8x8xi1>, vector<4x8x8xf32>
    %cst_22 = arith.constant dense<0xFF800000> : vector<4x8xf32>
    %71 = vector.multi_reduction <maximumf>, %70, %cst_22 [2] : vector<4x8x8xf32> to vector<4x8xf32>
    %72 = vector.shape_cast %71 : vector<4x8xf32> to vector<4x8x1xf32>
    %73 = vector.broadcast %72 : vector<4x8x1xf32> to vector<4x8x8xf32>
    %74 = arith.subf %70, %73 : vector<4x8x8xf32>
    %75 = math.exp %74 : vector<4x8x8xf32>
    %cst_23 = arith.constant dense<0.000000e+00> : vector<4x8xf32>
    %76 = vector.multi_reduction <add>, %75, %cst_23 [2] : vector<4x8x8xf32> to vector<4x8xf32>
    %77 = vector.shape_cast %76 : vector<4x8xf32> to vector<4x8x1xf32>
    %78 = vector.broadcast %77 : vector<4x8x1xf32> to vector<4x8x8xf32>
    %79 = arith.divf %75, %78 : vector<4x8x8xf32>
    "tpu.trace_start"() <{level = 10 : i32, message = "hts,hsd->htd"}> : () -> ()
    %cst_24 = arith.constant dense<0.000000e+00> : vector<4x8x8xf32>
    %80 = tpu.matmul %79, %63, %cst_24 {dimension_numbers = #tpu.dot_dimension_numbers<[2], [1], [1], [2], [0, 0, 0, 1, 1, 2], [0], [0]>} : vector<4x8x8xf32>, vector<4x8x8xf32>, vector<4x8x8xf32> -> vector<4x8x8xf32>
    "tpu.trace_stop"() : () -> ()
    %81 = arith.truncf %80 : vector<4x8x8xf32> to vector<4x8x8xbf16>
    "tpu.trace_start"() <{level = 10 : i32, message = "htd,hdc->htc"}> : () -> ()
    %cst_25 = arith.constant dense<0.000000e+00> : vector<4x8x32xf32>
    %82 = tpu.matmul %81, %36, %cst_25 {dimension_numbers = #tpu.dot_dimension_numbers<[2], [1], [1], [2], [0, 0, 0, 1, 1, 2], [0], [0]>} : vector<4x8x8xbf16>, vector<4x8x32xbf16>, vector<4x8x32xf32> -> vector<4x8x32xf32>
    "tpu.trace_stop"() : () -> ()
    %cst_26 = arith.constant dense<0.000000e+00> : vector<8x32xf32>
    %83 = vector.multi_reduction <add>, %82, %cst_26 [0] : vector<4x8x32xf32> to vector<8x32xf32>
    %84 = arith.addf %0, %83 : vector<8x32xf32>
    %c0_27 = arith.constant 0 : index
    %c0_28 = arith.constant 0 : index
    %c0_29 = arith.constant 0 : index
    %85 = vector.load %arg6[%c0_27, %c0_28, %c0_29] : memref<2x1x32xf32, #tpu.memory_space<vmem>>, vector<1x1x32xf32>
    %86 = vector.shape_cast %85 : vector<1x1x32xf32> to vector<1x32xf32>
    %87 = vector.broadcast %86 : vector<1x32xf32> to vector<8x32xf32>
    %88 = arith.addf %84, %87 : vector<8x32xf32>
    %c0_30 = arith.constant 0 : index
    %c0_31 = arith.constant 0 : index
    %c0_32 = arith.constant 0 : index
    %89 = vector.load %arg7[%c0_30, %c0_31, %c0_32] : memref<2x1x32xf32, #tpu.memory_space<vmem>>, vector<1x1x32xf32>
    %90 = vector.shape_cast %89 : vector<1x1x32xf32> to vector<1x32xf32>
    %c0_33 = arith.constant 0 : index
    %c0_34 = arith.constant 0 : index
    %c0_35 = arith.constant 0 : index
    %91 = vector.load %arg8[%c0_33, %c0_34, %c0_35] : memref<2x1x32xf32, #tpu.memory_space<vmem>>, vector<1x1x32xf32>
    %92 = vector.shape_cast %91 : vector<1x1x32xf32> to vector<1x32xf32>
    %cst_36 = arith.constant dense<0.000000e+00> : vector<8xf32>
    %93 = vector.multi_reduction <add>, %88, %cst_36 [1] : vector<8x32xf32> to vector<8xf32>
    %94 = vector.shape_cast %93 : vector<8xf32> to vector<8x1xf32>
    %cst_37 = arith.constant 3.200000e+01 : f32
    %95 = vector.broadcast %cst_37 : f32 to vector<8x1xf32>
    %96 = arith.divf %94, %95 : vector<8x1xf32>
    %97 = vector.broadcast %96 : vector<8x1xf32> to vector<8x32xf32>
    %98 = arith.subf %88, %97 : vector<8x32xf32>
    %99 = arith.mulf %98, %98 : vector<8x32xf32>
    %cst_38 = arith.constant dense<0.000000e+00> : vector<8xf32>
    %100 = vector.multi_reduction <add>, %99, %cst_38 [1] : vector<8x32xf32> to vector<8xf32>
    %101 = vector.shape_cast %100 : vector<8xf32> to vector<8x1xf32>
    %cst_39 = arith.constant 3.200000e+01 : f32
    %102 = vector.broadcast %cst_39 : f32 to vector<8x1xf32>
    %103 = arith.divf %101, %102 : vector<8x1xf32>
    %104 = vector.broadcast %96 : vector<8x1xf32> to vector<8x32xf32>
    %105 = arith.subf %88, %104 : vector<8x32xf32>
    %cst_40 = arith.constant 9.99999974E-6 : f32
    %106 = vector.broadcast %cst_40 : f32 to vector<8x1xf32>
    %107 = arith.addf %103, %106 : vector<8x1xf32>
    %108 = math.rsqrt %107 : vector<8x1xf32>
    %109 = vector.broadcast %108 : vector<8x1xf32> to vector<8x32xf32>
    %110 = arith.mulf %105, %109 : vector<8x32xf32>
    %111 = vector.broadcast %90 : vector<1x32xf32> to vector<8x32xf32>
    %112 = arith.mulf %110, %111 : vector<8x32xf32>
    %113 = vector.broadcast %92 : vector<1x32xf32> to vector<8x32xf32>
    %114 = arith.addf %112, %113 : vector<8x32xf32>
    %115 = arith.truncf %114 : vector<8x32xf32> to vector<8x32xbf16>
    %c0_41 = arith.constant 0 : index
    %c0_42 = arith.constant 0 : index
    %c0_43 = arith.constant 0 : index
    %116 = vector.load %arg9[%c0_41, %c0_42, %c0_43] : memref<2x32x128xbf16, #tpu.memory_space<vmem>>, vector<1x32x128xbf16>
    %117 = vector.shape_cast %116 : vector<1x32x128xbf16> to vector<32x128xbf16>
    %cst_44 = arith.constant dense<0.000000e+00> : vector<8x128xf32>
    %118 = tpu.matmul %115, %117, %cst_44 {dimension_numbers = #tpu.dot_dimension_numbers<[1], [0], [0], [1], [0, 0, 1, 1], [], []>} : vector<8x32xbf16>, vector<32x128xbf16>, vector<8x128xf32> -> vector<8x128xf32>
    %c0_45 = arith.constant 0 : index
    %c0_46 = arith.constant 0 : index
    %c0_47 = arith.constant 0 : index
    %119 = vector.load %arg10[%c0_45, %c0_46, %c0_47] : memref<2x1x128xf32, #tpu.memory_space<vmem>>, vector<1x1x128xf32>
    %120 = vector.shape_cast %119 : vector<1x1x128xf32> to vector<1x128xf32>
    %121 = vector.broadcast %120 : vector<1x128xf32> to vector<8x128xf32>
    %122 = arith.addf %118, %121 : vector<8x128xf32>
    %cst_48 = arith.constant 0.000000e+00 : f32
    %123 = vector.broadcast %cst_48 : f32 to vector<8x128xf32>
    %124 = arith.maximumf %122, %123 : vector<8x128xf32>
    %125 = arith.truncf %124 : vector<8x128xf32> to vector<8x128xbf16>
    %c0_49 = arith.constant 0 : index
    %c0_50 = arith.constant 0 : index
    %c0_51 = arith.constant 0 : index
    %126 = vector.load %arg11[%c0_49, %c0_50, %c0_51] : memref<2x128x32xbf16, #tpu.memory_space<vmem>>, vector<1x128x32xbf16>
    %127 = vector.shape_cast %126 : vector<1x128x32xbf16> to vector<128x32xbf16>
    %cst_52 = arith.constant dense<0.000000e+00> : vector<8x32xf32>
    %128 = tpu.matmul %125, %127, %cst_52 {dimension_numbers = #tpu.dot_dimension_numbers<[1], [0], [0], [1], [0, 0, 1, 1], [], []>} : vector<8x128xbf16>, vector<128x32xbf16>, vector<8x32xf32> -> vector<8x32xf32>
    %129 = arith.addf %88, %128 : vector<8x32xf32>
    %c0_53 = arith.constant 0 : index
    %c0_54 = arith.constant 0 : index
    %c0_55 = arith.constant 0 : index
    %130 = vector.load %arg12[%c0_53, %c0_54, %c0_55] : memref<2x1x32xf32, #tpu.memory_space<vmem>>, vector<1x1x32xf32>
    %131 = vector.shape_cast %130 : vector<1x1x32xf32> to vector<1x32xf32>
    %132 = vector.broadcast %131 : vector<1x32xf32> to vector<8x32xf32>
    %133 = arith.addf %129, %132 : vector<8x32xf32>
    %c1 = arith.constant 1 : index
    %c0_56 = arith.constant 0 : index
    %c0_57 = arith.constant 0 : index
    %134 = vector.load %arg2[%c1, %c0_56, %c0_57] : memref<2x1x32xf32, #tpu.memory_space<vmem>>, vector<1x1x32xf32>
    %135 = vector.shape_cast %134 : vector<1x1x32xf32> to vector<1x32xf32>
    %c1_58 = arith.constant 1 : index
    %c0_59 = arith.constant 0 : index
    %c0_60 = arith.constant 0 : index
    %136 = vector.load %arg3[%c1_58, %c0_59, %c0_60] : memref<2x1x32xf32, #tpu.memory_space<vmem>>, vector<1x1x32xf32>
    %137 = vector.shape_cast %136 : vector<1x1x32xf32> to vector<1x32xf32>
    %cst_61 = arith.constant dense<0.000000e+00> : vector<8xf32>
    %138 = vector.multi_reduction <add>, %133, %cst_61 [1] : vector<8x32xf32> to vector<8xf32>
    %139 = vector.shape_cast %138 : vector<8xf32> to vector<8x1xf32>
    %cst_62 = arith.constant 3.200000e+01 : f32
    %140 = vector.broadcast %cst_62 : f32 to vector<8x1xf32>
    %141 = arith.divf %139, %140 : vector<8x1xf32>
    %142 = vector.broadcast %141 : vector<8x1xf32> to vector<8x32xf32>
    %143 = arith.subf %133, %142 : vector<8x32xf32>
    %144 = arith.mulf %143, %143 : vector<8x32xf32>
    %cst_63 = arith.constant dense<0.000000e+00> : vector<8xf32>
    %145 = vector.multi_reduction <add>, %144, %cst_63 [1] : vector<8x32xf32> to vector<8xf32>
    %146 = vector.shape_cast %145 : vector<8xf32> to vector<8x1xf32>
    %cst_64 = arith.constant 3.200000e+01 : f32
    %147 = vector.broadcast %cst_64 : f32 to vector<8x1xf32>
    %148 = arith.divf %146, %147 : vector<8x1xf32>
    %149 = vector.broadcast %141 : vector<8x1xf32> to vector<8x32xf32>
    %150 = arith.subf %133, %149 : vector<8x32xf32>
    %cst_65 = arith.constant 9.99999974E-6 : f32
    %151 = vector.broadcast %cst_65 : f32 to vector<8x1xf32>
    %152 = arith.addf %148, %151 : vector<8x1xf32>
    %153 = math.rsqrt %152 : vector<8x1xf32>
    %154 = vector.broadcast %153 : vector<8x1xf32> to vector<8x32xf32>
    %155 = arith.mulf %150, %154 : vector<8x32xf32>
    %156 = vector.broadcast %135 : vector<1x32xf32> to vector<8x32xf32>
    %157 = arith.mulf %155, %156 : vector<8x32xf32>
    %158 = vector.broadcast %137 : vector<1x32xf32> to vector<8x32xf32>
    %159 = arith.addf %157, %158 : vector<8x32xf32>
    %160 = arith.truncf %159 : vector<8x32xf32> to vector<8x32xbf16>
    %c1_66 = arith.constant 1 : index
    %c0_67 = arith.constant 0 : index
    %c0_68 = arith.constant 0 : index
    %161 = vector.load %arg4[%c1_66, %c0_67, %c0_68] : memref<2x32x96xbf16, #tpu.memory_space<vmem>>, vector<1x32x96xbf16>
    %162 = vector.shape_cast %161 : vector<1x32x96xbf16> to vector<32x96xbf16>
    %cst_69 = arith.constant dense<0.000000e+00> : vector<8x96xf32>
    %163 = tpu.matmul %160, %162, %cst_69 {dimension_numbers = #tpu.dot_dimension_numbers<[1], [0], [0], [1], [0, 0, 1, 1], [], []>} : vector<8x32xbf16>, vector<32x96xbf16>, vector<8x96xf32> -> vector<8x96xf32>
    %c1_70 = arith.constant 1 : index
    %c0_71 = arith.constant 0 : index
    %c0_72 = arith.constant 0 : index
    %c0_73 = arith.constant 0 : index
    %164 = vector.load %arg5[%c1_70, %c0_71, %c0_72, %c0_73] : memref<2x4x8x32xbf16, #tpu.memory_space<vmem>>, vector<1x4x8x32xbf16>
    %165 = vector.shape_cast %164 : vector<1x4x8x32xbf16> to vector<4x8x32xbf16>
    %166 = vector.extract_strided_slice %163 {offsets = [0, 0], sizes = [8, 8], strides = [1, 1]} : vector<8x96xf32> to vector<8x8xf32>
    %167 = vector.extract_strided_slice %163 {offsets = [0, 8], sizes = [8, 8], strides = [1, 1]} : vector<8x96xf32> to vector<8x8xf32>
    %168 = vector.extract_strided_slice %163 {offsets = [0, 16], sizes = [8, 8], strides = [1, 1]} : vector<8x96xf32> to vector<8x8xf32>
    %169 = vector.extract_strided_slice %163 {offsets = [0, 24], sizes = [8, 8], strides = [1, 1]} : vector<8x96xf32> to vector<8x8xf32>
    %170 = vector.shape_cast %166 : vector<8x8xf32> to vector<1x8x8xf32>
    %171 = vector.shape_cast %167 : vector<8x8xf32> to vector<1x8x8xf32>
    %172 = vector.shape_cast %168 : vector<8x8xf32> to vector<1x8x8xf32>
    %173 = vector.shape_cast %169 : vector<8x8xf32> to vector<1x8x8xf32>
    %174 = tpu.concatenate %170, %171, %172, %173 in 0 : vector<1x8x8xf32>, vector<1x8x8xf32>, vector<1x8x8xf32>, vector<1x8x8xf32> -> vector<4x8x8xf32>
    %175 = vector.extract_strided_slice %163 {offsets = [0, 32], sizes = [8, 8], strides = [1, 1]} : vector<8x96xf32> to vector<8x8xf32>
    %176 = vector.extract_strided_slice %163 {offsets = [0, 40], sizes = [8, 8], strides = [1, 1]} : vector<8x96xf32> to vector<8x8xf32>
    %177 = vector.extract_strided_slice %163 {offsets = [0, 48], sizes = [8, 8], strides = [1, 1]} : vector<8x96xf32> to vector<8x8xf32>
    %178 = vector.extract_strided_slice %163 {offsets = [0, 56], sizes = [8, 8], strides = [1, 1]} : vector<8x96xf32> to vector<8x8xf32>
    %179 = vector.shape_cast %175 : vector<8x8xf32> to vector<1x8x8xf32>
    %180 = vector.shape_cast %176 : vector<8x8xf32> to vector<1x8x8xf32>
    %181 = vector.shape_cast %177 : vector<8x8xf32> to vector<1x8x8xf32>
    %182 = vector.shape_cast %178 : vector<8x8xf32> to vector<1x8x8xf32>
    %183 = tpu.concatenate %179, %180, %181, %182 in 0 : vector<1x8x8xf32>, vector<1x8x8xf32>, vector<1x8x8xf32>, vector<1x8x8xf32> -> vector<4x8x8xf32>
    %184 = vector.extract_strided_slice %163 {offsets = [0, 64], sizes = [8, 8], strides = [1, 1]} : vector<8x96xf32> to vector<8x8xf32>
    %185 = vector.extract_strided_slice %163 {offsets = [0, 72], sizes = [8, 8], strides = [1, 1]} : vector<8x96xf32> to vector<8x8xf32>
    %186 = vector.extract_strided_slice %163 {offsets = [0, 80], sizes = [8, 8], strides = [1, 1]} : vector<8x96xf32> to vector<8x8xf32>
    %187 = vector.extract_strided_slice %163 {offsets = [0, 88], sizes = [8, 8], strides = [1, 1]} : vector<8x96xf32> to vector<8x8xf32>
    %188 = vector.shape_cast %184 : vector<8x8xf32> to vector<1x8x8xf32>
    %189 = vector.shape_cast %185 : vector<8x8xf32> to vector<1x8x8xf32>
    %190 = vector.shape_cast %186 : vector<8x8xf32> to vector<1x8x8xf32>
    %191 = vector.shape_cast %187 : vector<8x8xf32> to vector<1x8x8xf32>
    %192 = tpu.concatenate %188, %189, %190, %191 in 0 : vector<1x8x8xf32>, vector<1x8x8xf32>, vector<1x8x8xf32>, vector<1x8x8xf32> -> vector<4x8x8xf32>
    "tpu.trace_start"() <{level = 10 : i32, message = "htd,hsd->hts"}> : () -> ()
    %cst_74 = arith.constant dense<0.000000e+00> : vector<4x8x8xf32>
    %193 = tpu.matmul %174, %183, %cst_74 {dimension_numbers = #tpu.dot_dimension_numbers<[2], [2], [1], [1], [0, 0, 0, 1, 1, 1], [0], [0]>} : vector<4x8x8xf32>, vector<4x8x8xf32>, vector<4x8x8xf32> -> vector<4x8x8xf32>
    "tpu.trace_stop"() : () -> ()
    %cst_75 = arith.constant 0.176776692 : f32
    %194 = vector.broadcast %cst_75 : f32 to vector<4x8x8xf32>
    %195 = arith.mulf %193, %194 : vector<4x8x8xf32>
    %cst_76 = arith.constant -1.000000e+30 : f32
    %196 = vector.shape_cast %4 : vector<1x8x8xi1> to vector<1x8x8xi1>
    %197 = vector.broadcast %196 : vector<1x8x8xi1> to vector<4x8x8xi1>
    %198 = vector.broadcast %cst_76 : f32 to vector<4x8x8xf32>
    %199 = arith.select %197, %195, %198 : vector<4x8x8xi1>, vector<4x8x8xf32>
    %cst_77 = arith.constant dense<0xFF800000> : vector<4x8xf32>
    %200 = vector.multi_reduction <maximumf>, %199, %cst_77 [2] : vector<4x8x8xf32> to vector<4x8xf32>
    %201 = vector.shape_cast %200 : vector<4x8xf32> to vector<4x8x1xf32>
    %202 = vector.broadcast %201 : vector<4x8x1xf32> to vector<4x8x8xf32>
    %203 = arith.subf %199, %202 : vector<4x8x8xf32>
    %204 = math.exp %203 : vector<4x8x8xf32>
    %cst_78 = arith.constant dense<0.000000e+00> : vector<4x8xf32>
    %205 = vector.multi_reduction <add>, %204, %cst_78 [2] : vector<4x8x8xf32> to vector<4x8xf32>
    %206 = vector.shape_cast %205 : vector<4x8xf32> to vector<4x8x1xf32>
    %207 = vector.broadcast %206 : vector<4x8x1xf32> to vector<4x8x8xf32>
    %208 = arith.divf %204, %207 : vector<4x8x8xf32>
    "tpu.trace_start"() <{level = 10 : i32, message = "hts,hsd->htd"}> : () -> ()
    %cst_79 = arith.constant dense<0.000000e+00> : vector<4x8x8xf32>
    %209 = tpu.matmul %208, %192, %cst_79 {dimension_numbers = #tpu.dot_dimension_numbers<[2], [1], [1], [2], [0, 0, 0, 1, 1, 2], [0], [0]>} : vector<4x8x8xf32>, vector<4x8x8xf32>, vector<4x8x8xf32> -> vector<4x8x8xf32>
    "tpu.trace_stop"() : () -> ()
    %210 = arith.truncf %209 : vector<4x8x8xf32> to vector<4x8x8xbf16>
    "tpu.trace_start"() <{level = 10 : i32, message = "htd,hdc->htc"}> : () -> ()
    %cst_80 = arith.constant dense<0.000000e+00> : vector<4x8x32xf32>
    %211 = tpu.matmul %210, %165, %cst_80 {dimension_numbers = #tpu.dot_dimension_numbers<[2], [1], [1], [2], [0, 0, 0, 1, 1, 2], [0], [0]>} : vector<4x8x8xbf16>, vector<4x8x32xbf16>, vector<4x8x32xf32> -> vector<4x8x32xf32>
    "tpu.trace_stop"() : () -> ()
    %cst_81 = arith.constant dense<0.000000e+00> : vector<8x32xf32>
    %212 = vector.multi_reduction <add>, %211, %cst_81 [0] : vector<4x8x32xf32> to vector<8x32xf32>
    %213 = arith.addf %133, %212 : vector<8x32xf32>
    %c1_82 = arith.constant 1 : index
    %c0_83 = arith.constant 0 : index
    %c0_84 = arith.constant 0 : index
    %214 = vector.load %arg6[%c1_82, %c0_83, %c0_84] : memref<2x1x32xf32, #tpu.memory_space<vmem>>, vector<1x1x32xf32>
    %215 = vector.shape_cast %214 : vector<1x1x32xf32> to vector<1x32xf32>
    %216 = vector.broadcast %215 : vector<1x32xf32> to vector<8x32xf32>
    %217 = arith.addf %213, %216 : vector<8x32xf32>
    %c1_85 = arith.constant 1 : index
    %c0_86 = arith.constant 0 : index
    %c0_87 = arith.constant 0 : index
    %218 = vector.load %arg7[%c1_85, %c0_86, %c0_87] : memref<2x1x32xf32, #tpu.memory_space<vmem>>, vector<1x1x32xf32>
    %219 = vector.shape_cast %218 : vector<1x1x32xf32> to vector<1x32xf32>
    %c1_88 = arith.constant 1 : index
    %c0_89 = arith.constant 0 : index
    %c0_90 = arith.constant 0 : index
    %220 = vector.load %arg8[%c1_88, %c0_89, %c0_90] : memref<2x1x32xf32, #tpu.memory_space<vmem>>, vector<1x1x32xf32>
    %221 = vector.shape_cast %220 : vector<1x1x32xf32> to vector<1x32xf32>
    %cst_91 = arith.constant dense<0.000000e+00> : vector<8xf32>
    %222 = vector.multi_reduction <add>, %217, %cst_91 [1] : vector<8x32xf32> to vector<8xf32>
    %223 = vector.shape_cast %222 : vector<8xf32> to vector<8x1xf32>
    %cst_92 = arith.constant 3.200000e+01 : f32
    %224 = vector.broadcast %cst_92 : f32 to vector<8x1xf32>
    %225 = arith.divf %223, %224 : vector<8x1xf32>
    %226 = vector.broadcast %225 : vector<8x1xf32> to vector<8x32xf32>
    %227 = arith.subf %217, %226 : vector<8x32xf32>
    %228 = arith.mulf %227, %227 : vector<8x32xf32>
    %cst_93 = arith.constant dense<0.000000e+00> : vector<8xf32>
    %229 = vector.multi_reduction <add>, %228, %cst_93 [1] : vector<8x32xf32> to vector<8xf32>
    %230 = vector.shape_cast %229 : vector<8xf32> to vector<8x1xf32>
    %cst_94 = arith.constant 3.200000e+01 : f32
    %231 = vector.broadcast %cst_94 : f32 to vector<8x1xf32>
    %232 = arith.divf %230, %231 : vector<8x1xf32>
    %233 = vector.broadcast %225 : vector<8x1xf32> to vector<8x32xf32>
    %234 = arith.subf %217, %233 : vector<8x32xf32>
    %cst_95 = arith.constant 9.99999974E-6 : f32
    %235 = vector.broadcast %cst_95 : f32 to vector<8x1xf32>
    %236 = arith.addf %232, %235 : vector<8x1xf32>
    %237 = math.rsqrt %236 : vector<8x1xf32>
    %238 = vector.broadcast %237 : vector<8x1xf32> to vector<8x32xf32>
    %239 = arith.mulf %234, %238 : vector<8x32xf32>
    %240 = vector.broadcast %219 : vector<1x32xf32> to vector<8x32xf32>
    %241 = arith.mulf %239, %240 : vector<8x32xf32>
    %242 = vector.broadcast %221 : vector<1x32xf32> to vector<8x32xf32>
    %243 = arith.addf %241, %242 : vector<8x32xf32>
    %244 = arith.truncf %243 : vector<8x32xf32> to vector<8x32xbf16>
    %c1_96 = arith.constant 1 : index
    %c0_97 = arith.constant 0 : index
    %c0_98 = arith.constant 0 : index
    %245 = vector.load %arg9[%c1_96, %c0_97, %c0_98] : memref<2x32x128xbf16, #tpu.memory_space<vmem>>, vector<1x32x128xbf16>
    %246 = vector.shape_cast %245 : vector<1x32x128xbf16> to vector<32x128xbf16>
    %cst_99 = arith.constant dense<0.000000e+00> : vector<8x128xf32>
    %247 = tpu.matmul %244, %246, %cst_99 {dimension_numbers = #tpu.dot_dimension_numbers<[1], [0], [0], [1], [0, 0, 1, 1], [], []>} : vector<8x32xbf16>, vector<32x128xbf16>, vector<8x128xf32> -> vector<8x128xf32>
    %c1_100 = arith.constant 1 : index
    %c0_101 = arith.constant 0 : index
    %c0_102 = arith.constant 0 : index
    %248 = vector.load %arg10[%c1_100, %c0_101, %c0_102] : memref<2x1x128xf32, #tpu.memory_space<vmem>>, vector<1x1x128xf32>
    %249 = vector.shape_cast %248 : vector<1x1x128xf32> to vector<1x128xf32>
    %250 = vector.broadcast %249 : vector<1x128xf32> to vector<8x128xf32>
    %251 = arith.addf %247, %250 : vector<8x128xf32>
    %cst_103 = arith.constant 0.000000e+00 : f32
    %252 = vector.broadcast %cst_103 : f32 to vector<8x128xf32>
    %253 = arith.maximumf %251, %252 : vector<8x128xf32>
    %254 = arith.truncf %253 : vector<8x128xf32> to vector<8x128xbf16>
    %c1_104 = arith.constant 1 : index
    %c0_105 = arith.constant 0 : index
    %c0_106 = arith.constant 0 : index
    %255 = vector.load %arg11[%c1_104, %c0_105, %c0_106] : memref<2x128x32xbf16, #tpu.memory_space<vmem>>, vector<1x128x32xbf16>
    %256 = vector.shape_cast %255 : vector<1x128x32xbf16> to vector<128x32xbf16>
    %cst_107 = arith.constant dense<0.000000e+00> : vector<8x32xf32>
    %257 = tpu.matmul %254, %256, %cst_107 {dimension_numbers = #tpu.dot_dimension_numbers<[1], [0], [0], [1], [0, 0, 1, 1], [], []>} : vector<8x128xbf16>, vector<128x32xbf16>, vector<8x32xf32> -> vector<8x32xf32>
    %258 = arith.addf %217, %257 : vector<8x32xf32>
    %c1_108 = arith.constant 1 : index
    %c0_109 = arith.constant 0 : index
    %c0_110 = arith.constant 0 : index
    %259 = vector.load %arg12[%c1_108, %c0_109, %c0_110] : memref<2x1x32xf32, #tpu.memory_space<vmem>>, vector<1x1x32xf32>
    %260 = vector.shape_cast %259 : vector<1x1x32xf32> to vector<1x32xf32>
    %261 = vector.broadcast %260 : vector<1x32xf32> to vector<8x32xf32>
    %262 = arith.addf %258, %261 : vector<8x32xf32>
    %c0_111 = arith.constant 0 : index
    %c0_112 = arith.constant 0 : index
    %263 = vector.load %arg13[%c0_111, %c0_112] : memref<1x32xf32, #tpu.memory_space<vmem>>, vector<1x32xf32>
    %c0_113 = arith.constant 0 : index
    %c0_114 = arith.constant 0 : index
    %264 = vector.load %arg14[%c0_113, %c0_114] : memref<1x32xf32, #tpu.memory_space<vmem>>, vector<1x32xf32>
    %cst_115 = arith.constant dense<0.000000e+00> : vector<8xf32>
    %265 = vector.multi_reduction <add>, %262, %cst_115 [1] : vector<8x32xf32> to vector<8xf32>
    %266 = vector.shape_cast %265 : vector<8xf32> to vector<8x1xf32>
    %cst_116 = arith.constant 3.200000e+01 : f32
    %267 = vector.broadcast %cst_116 : f32 to vector<8x1xf32>
    %268 = arith.divf %266, %267 : vector<8x1xf32>
    %269 = vector.broadcast %268 : vector<8x1xf32> to vector<8x32xf32>
    %270 = arith.subf %262, %269 : vector<8x32xf32>
    %271 = arith.mulf %270, %270 : vector<8x32xf32>
    %cst_117 = arith.constant dense<0.000000e+00> : vector<8xf32>
    %272 = vector.multi_reduction <add>, %271, %cst_117 [1] : vector<8x32xf32> to vector<8xf32>
    %273 = vector.shape_cast %272 : vector<8xf32> to vector<8x1xf32>
    %cst_118 = arith.constant 3.200000e+01 : f32
    %274 = vector.broadcast %cst_118 : f32 to vector<8x1xf32>
    %275 = arith.divf %273, %274 : vector<8x1xf32>
    %276 = vector.broadcast %268 : vector<8x1xf32> to vector<8x32xf32>
    %277 = arith.subf %262, %276 : vector<8x32xf32>
    %cst_119 = arith.constant 9.99999974E-6 : f32
    %278 = vector.broadcast %cst_119 : f32 to vector<8x1xf32>
    %279 = arith.addf %275, %278 : vector<8x1xf32>
    %280 = math.rsqrt %279 : vector<8x1xf32>
    %281 = vector.broadcast %280 : vector<8x1xf32> to vector<8x32xf32>
    %282 = arith.mulf %277, %281 : vector<8x32xf32>
    %283 = vector.broadcast %263 : vector<1x32xf32> to vector<8x32xf32>
    %284 = arith.mulf %282, %283 : vector<8x32xf32>
    %285 = vector.broadcast %264 : vector<1x32xf32> to vector<8x32xf32>
    %286 = arith.addf %284, %285 : vector<8x32xf32>
    %287 = arith.truncf %286 : vector<8x32xf32> to vector<8x32xbf16>
    %c0_120 = arith.constant 0 : index
    %c0_121 = arith.constant 0 : index
    %288 = vector.load %arg15[%c0_120, %c0_121] : memref<32x128xbf16, #tpu.memory_space<vmem>>, vector<32x128xbf16>
    %cst_122 = arith.constant dense<0.000000e+00> : vector<8x128xf32>
    %289 = tpu.matmul %287, %288, %cst_122 {dimension_numbers = #tpu.dot_dimension_numbers<[1], [0], [0], [1], [0, 0, 1, 1], [], []>} : vector<8x32xbf16>, vector<32x128xbf16>, vector<8x128xf32> -> vector<8x128xf32>
    %c0_123 = arith.constant 0 : index
    %c0_124 = arith.constant 0 : index
    %290 = vector.load %arg16[%c0_123, %c0_124] : memref<1x128xf32, #tpu.memory_space<vmem>>, vector<1x128xf32>
    %291 = vector.broadcast %290 : vector<1x128xf32> to vector<8x128xf32>
    %292 = arith.addf %289, %291 : vector<8x128xf32>
    %c0_125 = arith.constant 0 : index
    %c0_126 = arith.constant 0 : index
    %293 = vector.load %arg17[%c0_125, %c0_126] : memref<8x128xf32, #tpu.memory_space<vmem>>, vector<8x128xf32>
    tpu.vector_store %arg17[%c0_125, %c0_126], %292 {strides = array<i32>} : memref<8x128xf32, #tpu.memory_space<vmem>>, vector<8x128xf32>,
    return
  }
  func.func @transform_0(%arg0: i32) -> (i32, i32) {
    %c0_i32 = arith.constant 0 : i32
    %c0_i32_0 = arith.constant 0 : i32
    return %arg0, %c0_i32 : i32, i32
  }
  func.func @transform_1(%arg0: i32) -> (i32, i32, i32) {
    %c0_i32 = arith.constant 0 : i32
    %c0_i32_0 = arith.constant 0 : i32
    %c0_i32_1 = arith.constant 0 : i32
    %c0_i32_2 = arith.constant 0 : i32
    return %c0_i32, %c0_i32_0, %c0_i32_1 : i32, i32, i32
  }
  func.func @transform_2(%arg0: i32) -> (i32, i32, i32) {
    %c0_i32 = arith.constant 0 : i32
    %c0_i32_0 = arith.constant 0 : i32
    %c0_i32_1 = arith.constant 0 : i32
    %c0_i32_2 = arith.constant 0 : i32
    return %c0_i32, %c0_i32_0, %c0_i32_1 : i32, i32, i32
  }
  func.func @transform_3(%arg0: i32) -> (i32, i32, i32) {
    %c0_i32 = arith.constant 0 : i32
    %c0_i32_0 = arith.constant 0 : i32
    %c0_i32_1 = arith.constant 0 : i32
    %c0_i32_2 = arith.constant 0 : i32
    return %c0_i32, %c0_i32_0, %c0_i32_1 : i32, i32, i32
  }
  func.func @transform_4(%arg0: i32) -> (i32, i32, i32, i32) {
    %c0_i32 = arith.constant 0 : i32
    %c0_i32_0 = arith.constant 0 : i32
    %c0_i32_1 = arith.constant 0 : i32
    %c0_i32_2 = arith.constant 0 : i32
    %c0_i32_3 = arith.constant 0 : i32
    return %c0_i32, %c0_i32_0, %c0_i32_1, %c0_i32_2 : i32, i32, i32, i32
  }
  func.func @transform_5(%arg0: i32) -> (i32, i32, i32) {
    %c0_i32 = arith.constant 0 : i32
    %c0_i32_0 = arith.constant 0 : i32
    %c0_i32_1 = arith.constant 0 : i32
    %c0_i32_2 = arith.constant 0 : i32
    return %c0_i32, %c0_i32_0, %c0_i32_1 : i32, i32, i32
  }
  func.func @transform_6(%arg0: i32) -> (i32, i32, i32) {
    %c0_i32 = arith.constant 0 : i32
    %c0_i32_0 = arith.constant 0 : i32
    %c0_i32_1 = arith.constant 0 : i32
    %c0_i32_2 = arith.constant 0 : i32
    return %c0_i32, %c0_i32_0, %c0_i32_1 : i32, i32, i32
  }
  func.func @transform_7(%arg0: i32) -> (i32, i32, i32) {
    %c0_i32 = arith.constant 0 : i32
    %c0_i32_0 = arith.constant 0 : i32
    %c0_i32_1 = arith.constant 0 : i32
    %c0_i32_2 = arith.constant 0 : i32
    return %c0_i32, %c0_i32_0, %c0_i32_1 : i32, i32, i32
  }
  func.func @transform_8(%arg0: i32) -> (i32, i32, i32) {
    %c0_i32 = arith.constant 0 : i32
    %c0_i32_0 = arith.constant 0 : i32
    %c0_i32_1 = arith.constant 0 : i32
    %c0_i32_2 = arith.constant 0 : i32
    return %c0_i32, %c0_i32_0, %c0_i32_1 : i32, i32, i32
  }
  func.func @transform_9(%arg0: i32) -> (i32, i32, i32) {
    %c0_i32 = arith.constant 0 : i32
    %c0_i32_0 = arith.constant 0 : i32
    %c0_i32_1 = arith.constant 0 : i32
    %c0_i32_2 = arith.constant 0 : i32
    return %c0_i32, %c0_i32_0, %c0_i32_1 : i32, i32, i32
  }
  func.func @transform_10(%arg0: i32) -> (i32, i32, i32) {
    %c0_i32 = arith.constant 0 : i32
    %c0_i32_0 = arith.constant 0 : i32
    %c0_i32_1 = arith.constant 0 : i32
    %c0_i32_2 = arith.constant 0 : i32
    return %c0_i32, %c0_i32_0, %c0_i32_1 : i32, i32, i32
  }
  func.func @transform_11(%arg0: i32) -> (i32, i32, i32) {
    %c0_i32 = arith.constant 0 : i32
    %c0_i32_0 = arith.constant 0 : i32
    %c0_i32_1 = arith.constant 0 : i32
    %c0_i32_2 = arith.constant 0 : i32
    return %c0_i32, %c0_i32_0, %c0_i32_1 : i32, i32, i32
  }
  func.func @transform_12(%arg0: i32) -> (i32, i32) {
    %c0_i32 = arith.constant 0 : i32
    %c0_i32_0 = arith.constant 0 : i32
    %c0_i32_1 = arith.constant 0 : i32
    return %c0_i32, %c0_i32_0 : i32, i32
  }
  func.func @transform_13(%arg0: i32) -> (i32, i32) {
    %c0_i32 = arith.constant 0 : i32
    %c0_i32_0 = arith.constant 0 : i32
    %c0_i32_1 = arith.constant 0 : i32
    return %c0_i32, %c0_i32_0 : i32, i32
  }
  func.func @transform_14(%arg0: i32) -> (i32, i32) {
    %c0_i32 = arith.constant 0 : i32
    %c0_i32_0 = arith.constant 0 : i32
    %c0_i32_1 = arith.constant 0 : i32
    return %c0_i32, %c0_i32_0 : i32, i32
  }
  func.func @transform_15(%arg0: i32) -> (i32, i32) {
    %c0_i32 = arith.constant 0 : i32
    %c0_i32_0 = arith.constant 0 : i32
    %c0_i32_1 = arith.constant 0 : i32
    return %c0_i32, %c0_i32_0 : i32, i32
  }
  func.func @transform_16(%arg0: i32) -> (i32, i32) {
    %c0_i32 = arith.constant 0 : i32
    %c0_i32_0 = arith.constant 0 : i32
    return %arg0, %c0_i32 : i32, i32
  }
}

</mosaic_0001>

<llo_original>
// kernel: _lambda_.1
$region0: #{_lambda_.1}
  #allocation0 [shape = 'u32[]', space=smem, size = 0x4, offset = 0x4, fixed_abs, tag = 'smem constant byte address 0x4 - core index']
  #allocation1 [shape = 'u32[72,128]{1,0:T(1,128)}', space=vmem, size = 0x9000, scoped, tag = 'internal scratch']
  %s0 = inlined_call_operand.vmem [shape: f32[16,32], index: 0, kind: input, shape index: {}]
  %s1 = inlined_call_operand.vmem [shape: f32[2,1,32], index: 1, kind: input, shape index: {}]
  %s2 = inlined_call_operand.vmem [shape: f32[2,1,32], index: 2, kind: input, shape index: {}]
  %s3 = inlined_call_operand.vmem [shape: bf16[2,32,96], index: 3, kind: input, shape index: {}]
  %s4 = inlined_call_operand.vmem [shape: bf16[2,4,8,32], index: 4, kind: input, shape index: {}]
  %s5 = inlined_call_operand.vmem [shape: f32[2,1,32], index: 5, kind: input, shape index: {}]
  %s6 = inlined_call_operand.vmem [shape: f32[2,1,32], index: 6, kind: input, shape index: {}]
  %s7 = inlined_call_operand.vmem [shape: f32[2,1,32], index: 7, kind: input, shape index: {}]
  %s8 = inlined_call_operand.vmem [shape: bf16[2,32,128], index: 8, kind: input, shape index: {}]
  %s9 = inlined_call_operand.vmem [shape: f32[2,1,128], index: 9, kind: input, shape index: {}]
  %s10 = inlined_call_operand.vmem [shape: bf16[2,128,32], index: 10, kind: input, shape index: {}]
  %s11 = inlined_call_operand.vmem [shape: f32[2,1,32], index: 11, kind: input, shape index: {}]
  %s12 = inlined_call_operand.vmem [shape: f32[1,32], index: 12, kind: input, shape index: {}]
  %s13 = inlined_call_operand.vmem [shape: f32[1,32], index: 13, kind: input, shape index: {}]
  %s14 = inlined_call_operand.vmem [shape: bf16[32,128], index: 14, kind: input, shape index: {}]
  %s15 = inlined_call_operand.vmem [shape: f32[1,128], index: 15, kind: input, shape index: {}]
  %s16 = inlined_call_operand.vmem [shape: f32[16,128], index: 16, kind: output, shape index: {}]
  %s17 = sld [smem:[#allocation0]]
  $region97: #{_lambda_.1} parent=0
    _
  %s19 = ssub.s32 1, %s17
  %s20 = scalar_select 0, %s19, %s17
  loop: start=0, step=1, limit=4
  $region2: #{_lambda_.1} parent=0 // loop_pre_header
    _
  $region3: #{_lambda_.1} parent=0 // loop_header
    %s22 = sphi 0, %s26
    %p23 = scmp.ge.s32.totalorder %s22, 4
    %s32 = sphi 0, %s34
    %s35 = sphi 0, %s32
    %s36 = sphi 0, %s35
    %s52 = sphi 0, %s36
    %s56 = sphi 0, %s56
    %s58 = sphi 0, %s56
    %s59 = sphi 0, %s58
    %s73 = sphi 0, %s59
    %s77 = sphi 0, %s77
    %s79 = sphi 0, %s77
    %s80 = sphi 0, %s79
    %s94 = sphi 0, %s80
    %s98 = sphi 0, %s98
    %s100 = sphi 0, %s98
    %s101 = sphi 0, %s100
    %s115 = sphi 0, %s101
    %s119 = sphi 0, %s119
    %s121 = sphi 0, %s119
    %s122 = sphi 0, %s121
    %s136 = sphi 0, %s122
    %s140 = sphi 0, %s140
    %s142 = sphi 0, %s140
    %s143 = sphi 0, %s142
    %s157 = sphi 0, %s143
    %s161 = sphi 0, %s161
    %s163 = sphi 0, %s161
    %s164 = sphi 0, %s163
    %s178 = sphi 0, %s164
    %s182 = sphi 0, %s182
    %s184 = sphi 0, %s182
    %s185 = sphi 0, %s184
    %s199 = sphi 0, %s185
    %s203 = sphi 0, %s203
    %s205 = sphi 0, %s203
    %s206 = sphi 0, %s205
    %s220 = sphi 0, %s206
    %s224 = sphi 0, %s224
    %s226 = sphi 0, %s224
    %s227 = sphi 0, %s226
    %s241 = sphi 0, %s227
    %s245 = sphi 0, %s245
    %s247 = sphi 0, %s245
    %s248 = sphi 0, %s247
    %s262 = sphi 0, %s248
    %s266 = sphi 0, %s266
    %s268 = sphi 0, %s266
    %s269 = sphi 0, %s268
    %s283 = sphi 0, %s269
    %s287 = sphi 0, %s287
    %s289 = sphi 0, %s287
    %s290 = sphi 0, %s289
    %s304 = sphi 0, %s290
    %s308 = sphi 0, %s308
    %s310 = sphi 0, %s308
    %s311 = sphi 0, %s310
    %s325 = sphi 0, %s311
    %s329 = sphi 0, %s329
    %s331 = sphi 0, %s329
    %s332 = sphi 0, %s331
    %s346 = sphi 0, %s332
    %s350 = sphi 0, %s350
    %s352 = sphi 0, %s350
    %s353 = sphi 0, %s352
    %s367 = sphi 0, %s353
    %s373 = sphi 0, %s375
    %s376 = sphi 0, %s373
    %s377 = sphi 0, %s376
    %s393 = sphi 0, %s377
  $region4: #{_lambda_.1} parent=0 // loop_header_branch
    %25 = sbr.rel (%p23) target = $region8
  $region5: #{_lambda_.1} parent=0 // loop_body
    %s27 = ssub.s32 %s22, 1
    %s28 = ssub.s32 %s22, 2
    %s29 = sadd.s32 %s22, 1
    %s30 = ssub.s32 %s22, %s29
    %p31 = scmp.eq.s32.totalorder %s30, 0
    %s33 = sadd.s32 %s32, 1
    %s34 = scalar_select %p31, %s32, %s33
    %p37 = pneg %p31
    %p38 = scmp.eq.s32.totalorder %s22, 1
    %p39 = por %p37, %p38
    %p40 = scmp.ne.s32.totalorder %s32, %s35
    %p41 = scmp.eq.s32.totalorder %s22, 0
    %p42 = por %p40, %p41
    %p43 = scmp.ne.s32.totalorder %s32, %s35
    %p44 = scmp.eq.s32.totalorder %s27, 1
    %p45 = por %p43, %p44
    %p46 = scmp.ne.s32.totalorder %s35, %s36
    %p47 = scmp.eq.s32.totalorder %s27, 0
    %p48 = por %p46, %p47
    %p49 = scmp.ne.s32.totalorder %s35, %s36
    %p50 = scmp.eq.s32.totalorder %s28, 1
    %p51 = por %p49, %p50
    %p53 = scmp.ne.s32.totalorder %s36, %s52
    %p54 = scmp.eq.s32.totalorder %s28, 0
    %p55 = por %p53, %p54
    %s57 = sadd.s32 %s56, 1
    %p60 = scmp.eq.s32.totalorder %s22, 1
    %p61 = scmp.ne.s32.totalorder %s56, %s58
    %p62 = scmp.eq.s32.totalorder %s22, 0
    %p63 = por %p61, %p62
    %p64 = scmp.ne.s32.totalorder %s56, %s58
    %p65 = scmp.eq.s32.totalorder %s27, 1
    %p66 = por %p64, %p65
    %p67 = scmp.ne.s32.totalorder %s58, %s59
    %p68 = scmp.eq.s32.totalorder %s27, 0
    %p69 = por %p67, %p68
    %p70 = scmp.ne.s32.totalorder %s58, %s59
    %p71 = scmp.eq.s32.totalorder %s28, 1
    %p72 = por %p70, %p71
    %p74 = scmp.ne.s32.totalorder %s59, %s73
    %p75 = scmp.eq.s32.totalorder %s28, 0
    %p76 = por %p74, %p75
    %s78 = sadd.s32 %s77, 1
    %p81 = scmp.eq.s32.totalorder %s22, 1
    %p82 = scmp.ne.s32.totalorder %s77, %s79
    %p83 = scmp.eq.s32.totalorder %s22, 0
    %p84 = por %p82, %p83
    %p85 = scmp.ne.s32.totalorder %s77, %s79
    %p86 = scmp.eq.s32.totalorder %s27, 1
    %p87 = por %p85, %p86
    %p88 = scmp.ne.s32.totalorder %s79, %s80
    %p89 = scmp.eq.s32.totalorder %s27, 0
    %p90 = por %p88, %p89
    %p91 = scmp.ne.s32.totalorder %s79, %s80
    %p92 = scmp.eq.s32.totalorder %s28, 1
    %p93 = por %p91, %p92
    %p95 = scmp.ne.s32.totalorder %s80, %s94
    %p96 = scmp.eq.s32.totalorder %s28, 0
    %p97 = por %p95, %p96
    %s99 = sadd.s32 %s98, 1
    %p102 = scmp.eq.s32.totalorder %s22, 1
    %p103 = scmp.ne.s32.totalorder %s98, %s100
    %p104 = scmp.eq.s32.totalorder %s22, 0
    %p105 = por %p103, %p104
    %p106 = scmp.ne.s32.totalorder %s98, %s100
    %p107 = scmp.eq.s32.totalorder %s27, 1
    %p108 = por %p106, %p107
    %p109 = scmp.ne.s32.totalorder %s100, %s101
    %p110 = scmp.eq.s32.totalorder %s27, 0
    %p111 = por %p109, %p110
    %p112 = scmp.ne.s32.totalorder %s100, %s101
    %p113 = scmp.eq.s32.totalorder %s28, 1
    %p114 = por %p112, %p113
    %p116 = scmp.ne.s32.totalorder %s101, %s115
    %p117 = scmp.eq.s32.totalorder %s28, 0
    %p118 = por %p116, %p117
    %s120 = sadd.s32 %s119, 1
    %p123 = scmp.eq.s32.totalorder %s22, 1
    %p124 = scmp.ne.s32.totalorder %s119, %s121
    %p125 = scmp.eq.s32.totalorder %s22, 0
    %p126 = por %p124, %p125
    %p127 = scmp.ne.s32.totalorder %s119, %s121
    %p128 = scmp.eq.s32.totalorder %s27, 1
    %p129 = por %p127, %p128
    %p130 = scmp.ne.s32.totalorder %s121, %s122
    %p131 = scmp.eq.s32.totalorder %s27, 0
    %p132 = por %p130, %p131
    %p133 = scmp.ne.s32.totalorder %s121, %s122
    %p134 = scmp.eq.s32.totalorder %s28, 1
    %p135 = por %p133, %p134
    %p137 = scmp.ne.s32.totalorder %s122, %s136
    %p138 = scmp.eq.s32.totalorder %s28, 0
    %p139 = por %p137, %p138
    %s141 = sadd.s32 %s140, 1
    %p144 = scmp.eq.s32.totalorder %s22, 1
    %p145 = scmp.ne.s32.totalorder %s140, %s142
    %p146 = scmp.eq.s32.totalorder %s22, 0
    %p147 = por %p145, %p146
    %p148 = scmp.ne.s32.totalorder %s140, %s142
    %p149 = scmp.eq.s32.totalorder %s27, 1
    %p150 = por %p148, %p149
    %p151 = scmp.ne.s32.totalorder %s142, %s143
    %p152 = scmp.eq.s32.totalorder %s27, 0
    %p153 = por %p151, %p152
    %p154 = scmp.ne.s32.totalorder %s142, %s143
    %p155 = scmp.eq.s32.totalorder %s28, 1
    %p156 = por %p154, %p155
    %p158 = scmp.ne.s32.totalorder %s143, %s157
    %p159 = scmp.eq.s32.totalorder %s28, 0
    %p160 = por %p158, %p159
    %s162 = sadd.s32 %s161, 1
    %p165 = scmp.eq.s32.totalorder %s22, 1
    %p166 = scmp.ne.s32.totalorder %s161, %s163
    %p167 = scmp.eq.s32.totalorder %s22, 0
    %p168 = por %p166, %p167
    %p169 = scmp.ne.s32.totalorder %s161, %s163
    %p170 = scmp.eq.s32.totalorder %s27, 1
    %p171 = por %p169, %p170
    %p172 = scmp.ne.s32.totalorder %s163, %s164
    %p173 = scmp.eq.s32.totalorder %s27, 0
    %p174 = por %p172, %p173
    %p175 = scmp.ne.s32.totalorder %s163, %s164
    %p176 = scmp.eq.s32.totalorder %s28, 1
    %p177 = por %p175, %p176
    %p179 = scmp.ne.s32.totalorder %s164, %s178
    %p180 = scmp.eq.s32.totalorder %s28, 0
    %p181 = por %p179, %p180
    %s183 = sadd.s32 %s182, 1
    %p186 = scmp.eq.s32.totalorder %s22, 1
    %p187 = scmp.ne.s32.totalorder %s182, %s184
    %p188 = scmp.eq.s32.totalorder %s22, 0
    %p189 = por %p187, %p188
    %p190 = scmp.ne.s32.totalorder %s182, %s184
    %p191 = scmp.eq.s32.totalorder %s27, 1
    %p192 = por %p190, %p191
    %p193 = scmp.ne.s32.totalorder %s184, %s185
    %p194 = scmp.eq.s32.totalorder %s27, 0
    %p195 = por %p193, %p194
    %p196 = scmp.ne.s32.totalorder %s184, %s185
    %p197 = scmp.eq.s32.totalorder %s28, 1
    %p198 = por %p196, %p197
    %p200 = scmp.ne.s32.totalorder %s185, %s199
    %p201 = scmp.eq.s32.totalorder %s28, 0
    %p202 = por %p200, %p201
    %s204 = sadd.s32 %s203, 1
    %p207 = scmp.eq.s32.totalorder %s22, 1
    %p208 = scmp.ne.s32.totalorder %s203, %s205
    %p209 = scmp.eq.s32.totalorder %s22, 0
    %p210 = por %p208, %p209
    %p211 = scmp.ne.s32.totalorder %s203, %s205
    %p212 = scmp.eq.s32.totalorder %s27, 1
    %p213 = por %p211, %p212
    %p214 = scmp.ne.s32.totalorder %s205, %s206
    %p215 = scmp.eq.s32.totalorder %s27, 0
    %p216 = por %p214, %p215
    %p217 = scmp.ne.s32.totalorder %s205, %s206
    %p218 = scmp.eq.s32.totalorder %s28, 1
    %p219 = por %p217, %p218
    %p221 = scmp.ne.s32.totalorder %s206, %s220
    %p222 = scmp.eq.s32.totalorder %s28, 0
    %p223 = por %p221, %p222
    %s225 = sadd.s32 %s224, 1
    %p228 = scmp.eq.s32.totalorder %s22, 1
    %p229 = scmp.ne.s32.totalorder %s224, %s226
    %p230 = scmp.eq.s32.totalorder %s22, 0
    %p231 = por %p229, %p230
    %p232 = scmp.ne.s32.totalorder %s224, %s226
    %p233 = scmp.eq.s32.totalorder %s27, 1
    %p234 = por %p232, %p233
    %p235 = scmp.ne.s32.totalorder %s226, %s227
    %p236 = scmp.eq.s32.totalorder %s27, 0
    %p237 = por %p235, %p236
    %p238 = scmp.ne.s32.totalorder %s226, %s227
    %p239 = scmp.eq.s32.totalorder %s28, 1
    %p240 = por %p238, %p239
    %p242 = scmp.ne.s32.totalorder %s227, %s241
    %p243 = scmp.eq.s32.totalorder %s28, 0
    %p244 = por %p242, %p243
    %s246 = sadd.s32 %s245, 1
    %p249 = scmp.eq.s32.totalorder %s22, 1
    %p250 = scmp.ne.s32.totalorder %s245, %s247
    %p251 = scmp.eq.s32.totalorder %s22, 0
    %p252 = por %p250, %p251
    %p253 = scmp.ne.s32.totalorder %s245, %s247
    %p254 = scmp.eq.s32.totalorder %s27, 1
    %p255 = por %p253, %p254
    %p256 = scmp.ne.s32.totalorder %s247, %s248
    %p257 = scmp.eq.s32.totalorder %s27, 0
    %p258 = por %p256, %p257
    %p259 = scmp.ne.s32.totalorder %s247, %s248
    %p260 = scmp.eq.s32.totalorder %s28, 1
    %p261 = por %p259, %p260
    %p263 = scmp.ne.s32.totalorder %s248, %s262
    %p264 = scmp.eq.s32.totalorder %s28, 0
    %p265 = por %p263, %p264
    %s267 = sadd.s32 %s266, 1
    %p270 = scmp.eq.s32.totalorder %s22, 1
    %p271 = scmp.ne.s32.totalorder %s266, %s268
    %p272 = scmp.eq.s32.totalorder %s22, 0
    %p273 = por %p271, %p272
    %p274 = scmp.ne.s32.totalorder %s266, %s268
    %p275 = scmp.eq.s32.totalorder %s27, 1
    %p276 = por %p274, %p275
    %p277 = scmp.ne.s32.totalorder %s268, %s269
    %p278 = scmp.eq.s32.totalorder %s27, 0
    %p279 = por %p277, %p278
    %p280 = scmp.ne.s32.totalorder %s268, %s269
    %p281 = scmp.eq.s32.totalorder %s28, 1
    %p282 = por %p280, %p281
    %p284 = scmp.ne.s32.totalorder %s269, %s283
    %p285 = scmp.eq.s32.totalorder %s28, 0
    %p286 = por %p284, %p285
    %s288 = sadd.s32 %s287, 1
    %p291 = scmp.eq.s32.totalorder %s22, 1
    %p292 = scmp.ne.s32.totalorder %s287, %s289
    %p293 = scmp.eq.s32.totalorder %s22, 0
    %p294 = por %p292, %p293
    %p295 = scmp.ne.s32.totalorder %s287, %s289
    %p296 = scmp.eq.s32.totalorder %s27, 1
    %p297 = por %p295, %p296
    %p298 = scmp.ne.s32.totalorder %s289, %s290
    %p299 = scmp.eq.s32.totalorder %s27, 0
    %p300 = por %p298, %p299
    %p301 = scmp.ne.s32.totalorder %s289, %s290
    %p302 = scmp.eq.s32.totalorder %s28, 1
    %p303 = por %p301, %p302
    %p305 = scmp.ne.s32.totalorder %s290, %s304
    %p306 = scmp.eq.s32.totalorder %s28, 0
    %p307 = por %p305, %p306
    %s309 = sadd.s32 %s308, 1
    %p312 = scmp.eq.s32.totalorder %s22, 1
    %p313 = scmp.ne.s32.totalorder %s308, %s310
    %p314 = scmp.eq.s32.totalorder %s22, 0
    %p315 = por %p313, %p314
    %p316 = scmp.ne.s32.totalorder %s308, %s310
    %p317 = scmp.eq.s32.totalorder %s27, 1
    %p318 = por %p316, %p317
    %p319 = scmp.ne.s32.totalorder %s310, %s311
    %p320 = scmp.eq.s32.totalorder %s27, 0
    %p321 = por %p319, %p320
    %p322 = scmp.ne.s32.totalorder %s310, %s311
    %p323 = scmp.eq.s32.totalorder %s28, 1
    %p324 = por %p322, %p323
    %p326 = scmp.ne.s32.totalorder %s311, %s325
    %p327 = scmp.eq.s32.totalorder %s28, 0
    %p328 = por %p326, %p327
    %s330 = sadd.s32 %s329, 1
    %p333 = scmp.eq.s32.totalorder %s22, 1
    %p334 = scmp.ne.s32.totalorder %s329, %s331
    %p335 = scmp.eq.s32.totalorder %s22, 0
    %p336 = por %p334, %p335
    %p337 = scmp.ne.s32.totalorder %s329, %s331
    %p338 = scmp.eq.s32.totalorder %s27, 1
    %p339 = por %p337, %p338
    %p340 = scmp.ne.s32.totalorder %s331, %s332
    %p341 = scmp.eq.s32.totalorder %s27, 0
    %p342 = por %p340, %p341
    %p343 = scmp.ne.s32.totalorder %s331, %s332
    %p344 = scmp.eq.s32.totalorder %s28, 1
    %p345 = por %p343, %p344
    %p347 = scmp.ne.s32.totalorder %s332, %s346
    %p348 = scmp.eq.s32.totalorder %s28, 0
    %p349 = por %p347, %p348
    %s351 = sadd.s32 %s350, 1
    %p354 = scmp.eq.s32.totalorder %s22, 1
    %p355 = scmp.ne.s32.totalorder %s350, %s352
    %p356 = scmp.eq.s32.totalorder %s22, 0
    %p357 = por %p355, %p356
    %p358 = scmp.ne.s32.totalorder %s350, %s352
    %p359 = scmp.eq.s32.totalorder %s27, 1
    %p360 = por %p358, %p359
    %p361 = scmp.ne.s32.totalorder %s352, %s353
    %p362 = scmp.eq.s32.totalorder %s27, 0
    %p363 = por %p361, %p362
    %p364 = scmp.ne.s32.totalorder %s352, %s353
    %p365 = scmp.eq.s32.totalorder %s28, 1
    %p366 = por %p364, %p365
    %p368 = scmp.ne.s32.totalorder %s353, %s367
    %p369 = scmp.eq.s32.totalorder %s28, 0
    %p370 = por %p368, %p369
    %s371 = ssub.s32 %s22, %s29
    %p372 = scmp.eq.s32.totalorder %s371, 0
    %s374 = sadd.s32 %s373, 1
    %s375 = scalar_select %p372, %s373, %s374
    %p378 = pneg %p372
    %p379 = scmp.eq.s32.totalorder %s22, 1
    %p380 = por %p378, %p379
    %p381 = scmp.ne.s32.totalorder %s373, %s376
    %p382 = scmp.eq.s32.totalorder %s22, 0
    %p383 = por %p381, %p382
    %p384 = scmp.ne.s32.totalorder %s373, %s376
    %p385 = scmp.eq.s32.totalorder %s27, 1
    %p386 = por %p384, %p385
    %p387 = scmp.ne.s32.totalorder %s376, %s377
    %p388 = scmp.eq.s32.totalorder %s27, 0
    %p389 = por %p387, %p388
    %p390 = scmp.ne.s32.totalorder %s376, %s377
    %p391 = scmp.eq.s32.totalorder %s28, 1
    %p392 = por %p390, %p391
    %p394 = scmp.ne.s32.totalorder %s377, %s393
    %p395 = scmp.eq.s32.totalorder %s28, 0
    %p396 = por %p394, %p395
    %p397 = scmp.le.s32.totalorder 1, %s22
    %p398 = scmp.lt.s32.totalorder %s22, 3
    %p399 = pnand %p397, %p398
    %p400 = pneg %p399
    // Predicated region
    $region9: #{_lambda_.1} parent=5 // pred_check
      _
    $region10: #{_lambda_.1} parent=5 // pred_check_branch
      %402 = sbr.rel (%p399) target = $region12
    $region11: #{_lambda_.1} parent=5 // pred_region
      %s403 = ssub.s32 %s22, 1
      // Predicated region
      $region13: #{_lambda_.1} parent=11 // pred_check
        %p404 = pneg %p69
      $region14: #{_lambda_.1} parent=11 // pred_check_branch
        %406 = sbr.rel (%p404) target = $region16
      $region15: #{_lambda_.1} parent=11 // pred_region
        _
      $region16: #{_lambda_.1} parent=11 // pred_fallthru
        _
      // Predicated region
      $region17: #{_lambda_.1} parent=11 // pred_check
        %p407 = pneg %p90
      $region18: #{_lambda_.1} parent=11 // pred_check_branch
        %409 = sbr.rel (%p407) target = $region20
      $region19: #{_lambda_.1} parent=11 // pred_region
        _
      $region20: #{_lambda_.1} parent=11 // pred_fallthru
        _
      // Predicated region
      $region21: #{_lambda_.1} parent=11 // pred_check
        %p410 = pneg %p111
      $region22: #{_lambda_.1} parent=11 // pred_check_branch
        %412 = sbr.rel (%p410) target = $region24
      $region23: #{_lambda_.1} parent=11 // pred_region
        _
      $region24: #{_lambda_.1} parent=11 // pred_fallthru
        _
      // Predicated region
      $region25: #{_lambda_.1} parent=11 // pred_check
        %p413 = pneg %p132
      $region26: #{_lambda_.1} parent=11 // pred_check_branch
        %415 = sbr.rel (%p413) target = $region28
      $region27: #{_lambda_.1} parent=11 // pred_region
        _
      $region28: #{_lambda_.1} parent=11 // pred_fallthru
        _
      // Predicated region
      $region29: #{_lambda_.1} parent=11 // pred_check
        %p416 = pneg %p153
      $region30: #{_lambda_.1} parent=11 // pred_check_branch
        %418 = sbr.rel (%p416) target = $region32
      $region31: #{_lambda_.1} parent=11 // pred_region
        _
      $region32: #{_lambda_.1} parent=11 // pred_fallthru
        _
      // Predicated region
      $region33: #{_lambda_.1} parent=11 // pred_check
        %p419 = pneg %p174
      $region34: #{_lambda_.1} parent=11 // pred_check_branch
        %421 = sbr.rel (%p419) target = $region36
      $region35: #{_lambda_.1} parent=11 // pred_region
        _
      $region36: #{_lambda_.1} parent=11 // pred_fallthru
        _
      // Predicated region
      $region37: #{_lambda_.1} parent=11 // pred_check
        %p422 = pneg %p195
      $region38: #{_lambda_.1} parent=11 // pred_check_branch
        %424 = sbr.rel (%p422) target = $region40
      $region39: #{_lambda_.1} parent=11 // pred_region
        _
      $region40: #{_lambda_.1} parent=11 // pred_fallthru
        _
      // Predicated region
      $region41: #{_lambda_.1} parent=11 // pred_check
        %p425 = pneg %p216
      $region42: #{_lambda_.1} parent=11 // pred_check_branch
        %427 = sbr.rel (%p425) target = $region44
      $region43: #{_lambda_.1} parent=11 // pred_region
        _
      $region44: #{_lambda_.1} parent=11 // pred_fallthru
        _
      // Predicated region
      $region45: #{_lambda_.1} parent=11 // pred_check
        %p428 = pneg %p237
      $region46: #{_lambda_.1} parent=11 // pred_check_branch
        %430 = sbr.rel (%p428) target = $region48
      $region47: #{_lambda_.1} parent=11 // pred_region
        _
      $region48: #{_lambda_.1} parent=11 // pred_fallthru
        _
      // Predicated region
      $region49: #{_lambda_.1} parent=11 // pred_check
        %p431 = pneg %p258
      $region50: #{_lambda_.1} parent=11 // pred_check_branch
        %433 = sbr.rel (%p431) target = $region52
      $region51: #{_lambda_.1} parent=11 // pred_region
        _
      $region52: #{_lambda_.1} parent=11 // pred_fallthru
        _
      // Predicated region
      $region53: #{_lambda_.1} parent=11 // pred_check
        %p434 = pneg %p279
      $region54: #{_lambda_.1} parent=11 // pred_check_branch
        %436 = sbr.rel (%p434) target = $region56
      $region55: #{_lambda_.1} parent=11 // pred_region
        _
      $region56: #{_lambda_.1} parent=11 // pred_fallthru
        _
      // Predicated region
      $region57: #{_lambda_.1} parent=11 // pred_check
        %p437 = pneg %p300
      $region58: #{_lambda_.1} parent=11 // pred_check_branch
        %439 = sbr.rel (%p437) target = $region60
      $region59: #{_lambda_.1} parent=11 // pred_region
        _
      $region60: #{_lambda_.1} parent=11 // pred_fallthru
        _
      // Predicated region
      $region61: #{_lambda_.1} parent=11 // pred_check
        %p440 = pneg %p321
      $region62: #{_lambda_.1} parent=11 // pred_check_branch
        %442 = sbr.rel (%p440) target = $region64
      $region63: #{_lambda_.1} parent=11 // pred_region
        _
      $region64: #{_lambda_.1} parent=11 // pred_fallthru
        _
      // Predicated region
      $region65: #{_lambda_.1} parent=11 // pred_check
        %p443 = pneg %p342
      $region66: #{_lambda_.1} parent=11 // pred_check_branch
        %445 = sbr.rel (%p443) target = $region68
      $region67: #{_lambda_.1} parent=11 // pred_region
        _
      $region68: #{_lambda_.1} parent=11 // pred_fallthru
        _
      // Predicated region
      $region69: #{_lambda_.1} parent=11 // pred_check
        %p446 = pneg %p363
      $region70: #{_lambda_.1} parent=11 // pred_check_branch
        %448 = sbr.rel (%p446) target = $region72
      $region71: #{_lambda_.1} parent=11 // pred_region
        _
      $region72: #{_lambda_.1} parent=11 // pred_fallthru
        _
    $region12: #{_lambda_.1} parent=5 // pred_fallthru
      _
    %p449 = scmp.lt.s32.totalorder %s22, 2
    // Predicated region
    $region73: #{_lambda_.1} parent=5 // pred_check
      %p450 = pneg %p449
    $region74: #{_lambda_.1} parent=5 // pred_check_branch
      %452 = sbr.rel (%p450) target = $region76
    $region75: #{_lambda_.1} parent=5 // pred_region
      // Predicated region
      $region77: #{_lambda_.1} parent=75 // pred_check
        %p453 = pneg %p42
      $region78: #{_lambda_.1} parent=75 // pred_check_branch
        %455 = sbr.rel (%p453) target = $region80
      $region79: #{_lambda_.1} parent=75 // pred_region
        %p456 = scmp.lt.s32.totalorder %s22, 1
        %s457 = scalar_select %p456, %s22, 1
        %s458 = smul.addr %s457, 8
        %s459 = scalar_lea.vmem %s0, %s458
      $region80: #{_lambda_.1} parent=75 // pred_fallthru
        _
    $region76: #{_lambda_.1} parent=5 // pred_fallthru
      _
    %p460 = scmp.le.s32.totalorder 1, %s22
    %p461 = scmp.lt.s32.totalorder %s22, 3
    %p462 = pnand %p460, %p461
    %p463 = pneg %p462
    // Predicated region
    $region81: #{_lambda_.1} parent=5 // pred_check
      _
    $region82: #{_lambda_.1} parent=5 // pred_check_branch
      %465 = sbr.rel (%p462) target = $region84
    $region83: #{_lambda_.1} parent=5 // pred_region
      %s466 = ssub.s32 %s22, 1
      %p467 = scmp.lt.s32.totalorder %s27, 1
      %s468 = scalar_select %p467, %s27, 1
      %s469 = smul.addr %s468, 8
      %s470 = scalar_lea.vmem %s0, %s469
      %p471 = pneg %p48
      %p472 = pneg %p45
      %p473 = pneg %p69
      %p474 = pneg %p66
      %p475 = pneg %p90
      %p476 = pneg %p87
      %p477 = pneg %p111
      %p478 = pneg %p108
      %p479 = pneg %p132
      %p480 = pneg %p129
      %p481 = pneg %p153
      %p482 = pneg %p150
      %p483 = pneg %p174
      %p484 = pneg %p171
      %p485 = pneg %p195
      %p486 = pneg %p192
      %p487 = pneg %p216
      %p488 = pneg %p213
      %p489 = pneg %p237
      %p490 = pneg %p234
      %p491 = pneg %p258
      %p492 = pneg %p255
      %p493 = pneg %p279
      %p494 = pneg %p276
      %p495 = pneg %p300
      %p496 = pneg %p297
      %p497 = pneg %p321
      %p498 = pneg %p318
      %p499 = pneg %p342
      %p500 = pneg %p339
      %p501 = pneg %p363
      %p502 = pneg %p360
      %p503 = pneg %p389
      %p504 = pneg %p386
      %p505 = scmp.lt.s32.totalorder %s27, 1
      %s506 = scalar_select %p505, %s27, 1
      %s507 = smul.addr %s506, 8
      %s508 = scalar_lea.vmem %s16, %s507
      %p509 = scmp.lt.s32.totalorder %s27, 1
      %s510 = scalar_select %p509, %s27, 1
      %s511 = smul.addr %s510, 8
      %s512 = scalar_lea.vmem %s0, %s511
      %p513 = scmp.lt.s32.totalorder %s27, 1
      %s514 = scalar_select %p513, %s27, 1
      %s515 = smul.addr %s514, 8
      %s516 = scalar_lea.vmem %s16, %s515
      %v518 = vld [vmem:[%s512] sm:$0xff]
      %v519 = vlaneseq
      %v520 = vshrl.u32 %v519, 7
      %v521 = vlaneseq
      %v522 = vand.u32 %v521, 127
      %vm523 = vcmp.le.s32.totalorder %v522, %v520
      %v524 = vld [vmem:[%s1] sm:$0x1]
      %v525 = vld [vmem:[%s2] sm:$0x1]
      %vm526 = vcmask 261120
      %v527 = vsel %vm526, %v518, 0.0
      %528 = vadd.xlane.f32.xlu0 %v527
      %v529 = vpop.xlane.xlu0 %528
      %v530 = vrcp.pop 32.0
      %v531 = vmul.f32 32.0, %v530
      %v532 = vsub.f32 1.0, %v531
      %v533 = vmul.f32 %v530, %v532
      %v534 = vadd.f32 %v530, %v533
      %vm535 = vweird.f32 %v530
      %v536 = vsel %vm535, %v530, %v534
      %v537 = vmul.f32 %v529, %v536
      %v538 = vsub.f32 %v518, %v537
      %v539 = vmul.f32 %v538, %v538
      %v540 = vsel %vm526, %v539, 0.0
      %541 = vadd.xlane.f32.xlu0 %v540
      %v542 = vpop.xlane.xlu0 %541
      %v543 = vmul.f32 %v542, %v536
      %v544 = vadd.f32 %v543, 1e-05
      %v545 = vrsqrt.pop %v544
      %v546 = vmul.f32 %v545, %v544
      %v547 = vmul.f32 %v546, %v545
      %v548 = vmul.f32 0.5, %v547
      %v549 = vsub.f32 1.5, %v548
      %v550 = vmul.f32 %v545, %v549
      %vm551 = vweird.f32 %v544
      %vm552 = vweird.f32 %v545
      %vm553 = vmor %vm551, %vm552
      %v554 = vsel %vm553, %v545, %v550
      %v555 = vmul.f32 %v538, %v554
      %v557 = vperm.slane %v524, 0
      %v559 = vmul.f32 %v555, %v557
      %v561 = vperm.slane %v525, 0
      %v563 = vadd.f32 %v559, %v561
      %v564 = vpack.c.bf16 %v563, %v563
      %v565 = vld [vmem:[%s3] sm:$0xf]
      %v566 = vld [vmem:[%s3 + $0x4] sm:$0xf]
      %v567 = vld [vmem:[%s3 + $0x8] sm:$0xf]
      %v568 = vld [vmem:[%s3 + $0xc] sm:$0xf]
      %v573 = vunpack.c.l.b16 %v565
      %v574 = vunpack.c.l.b16 %v566
      %v575 = vunpack.c.l.b16 %v567
      %v576 = vunpack.c.l.b16 %v568
      %v577 = vpack.c.b16 %v574, %v573
      %v578 = vpack.c.b16 %v576, %v575
      %v582 = vsel %vm526, %v564, 0
      %584 = vmatpush.bf16.msra.mxu0 0
      %585 = vmatpush.bf16.msra.mxu0 0
      %586 = vmatpush.bf16.msra.mxu0 0
      %587 = vmatpush.bf16.msra.mxu0 0
      %588 = vmatpush.bf16.msra.mxu0 0
      %589 = vmatpush.bf16.msra.mxu0 0
      %590 = vmatpush.bf16.msra.mxu0 %v578
      %591 = vmatpush.bf16.msra.mxu0 %v577
      %592 = vmatmul.bf16.gmra.mxu0 %v582
      %v593 = vpop.f32.mrf.mxu0
      %v594 = vadd.f32 0.0, %v593
      %v595 = vpop.f32.mrf.mxu0
      %596 = vdwg.mxu0
      %v597 = vld [vmem:[%s4] sm:$0xf]
      %v598 = vld [vmem:[%s4 + $0x4] sm:$0xf]
      %v599 = vld [vmem:[%s4 + $0x8] sm:$0xf]
      %v600 = vld [vmem:[%s4 + $0xc] sm:$0xf]
      %602 = vrot.lane.b32.xlu0 %v594, 120
      %v603 = vpop.permute.xlu0 %602
      %604 = vrot.lane.b32.xlu0 %v594, 112
      %v605 = vpop.permute.xlu0 %604
      %606 = vrot.lane.b32.xlu0 %v594, 104
      %v607 = vpop.permute.xlu0 %606
      %608 = vrot.lane.b32.xlu0 %v594, 96
      %v609 = vpop.permute.xlu0 %608
      %vm610 = vcmask 64512
      %v611 = vsel %vm610, %v594, 0
      %v613 = vsel %vm610, %v609, 0
      %615 = vmatpush.xpose.msra.mxu0 0.0
      %616 = vmatpush.xpose.msra.mxu0 0.0
      %617 = vmatpush.xpose.msra.mxu0 0.0
      %618 = vmatpush.xpose.msra.mxu0 0.0
      %619 = vmatpush.xpose.msra.mxu0 0.0
      %620 = vmatpush.xpose.msra.mxu0 0.0
      %621 = vmatpush.xpose.msra.mxu0 0.0
      %622 = vmatpush.xpose.msra.mxu0 0.0
      %623 = vmatpush.xpose.msra.mxu0 0.0
      %624 = vmatpush.xpose.msra.mxu0 0.0
      %625 = vmatpush.xpose.msra.mxu0 0.0
      %626 = vmatpush.xpose.msra.mxu0 0.0
      %627 = vmatpush.xpose.msra.mxu0 0.0
      %628 = vmatpush.xpose.msra.mxu0 0.0
      %629 = vmatpush.xpose.msra.mxu0 0.0
      %630 = vmatpush.xpose.msra.mxu0 %v613
      %631 = vmatmul.f32.gmra.mxu0 %v611
      %v632 = vpop.f32.mrf.mxu0
      %v633 = vadd.f32 0.0, %v632
      %634 = vdwg.mxu0
      %635 = vrot.lane.b32.xlu0 %v603, 96
      %v636 = vpop.permute.xlu0 %635
      %v637 = vsel %vm610, %v603, 0
      %v639 = vsel %vm610, %v636, 0
      %641 = vmatpush.xpose.msra.mxu0 0.0
      %642 = vmatpush.xpose.msra.mxu0 0.0
      %643 = vmatpush.xpose.msra.mxu0 0.0
      %644 = vmatpush.xpose.msra.mxu0 0.0
      %645 = vmatpush.xpose.msra.mxu0 0.0
      %646 = vmatpush.xpose.msra.mxu0 0.0
      %647 = vmatpush.xpose.msra.mxu0 0.0
      %648 = vmatpush.xpose.msra.mxu0 0.0
      %649 = vmatpush.xpose.msra.mxu0 0.0
      %650 = vmatpush.xpose.msra.mxu0 0.0
      %651 = vmatpush.xpose.msra.mxu0 0.0
      %652 = vmatpush.xpose.msra.mxu0 0.0
      %653 = vmatpush.xpose.msra.mxu0 0.0
      %654 = vmatpush.xpose.msra.mxu0 0.0
      %655 = vmatpush.xpose.msra.mxu0 0.0
      %656 = vmatpush.xpose.msra.mxu0 %v639
      %657 = vmatmul.f32.gmra.mxu0 %v637
      %v658 = vpop.f32.mrf.mxu0
      %v659 = vadd.f32 0.0, %v658
      %660 = vdwg.mxu0
      %661 = vrot.lane.b32.xlu0 %v605, 96
      %v662 = vpop.permute.xlu0 %661
      %v663 = vsel %vm610, %v605, 0
      %v665 = vsel %vm610, %v662, 0
      %667 = vmatpush.xpose.msra.mxu0 0.0
      %668 = vmatpush.xpose.msra.mxu0 0.0
      %669 = vmatpush.xpose.msra.mxu0 0.0
      %670 = vmatpush.xpose.msra.mxu0 0.0
      %671 = vmatpush.xpose.msra.mxu0 0.0
      %672 = vmatpush.xpose.msra.mxu0 0.0
      %673 = vmatpush.xpose.msra.mxu0 0.0
      %674 = vmatpush.xpose.msra.mxu0 0.0
      %675 = vmatpush.xpose.msra.mxu0 0.0
      %676 = vmatpush.xpose.msra.mxu0 0.0
      %677 = vmatpush.xpose.msra.mxu0 0.0
      %678 = vmatpush.xpose.msra.mxu0 0.0
      %679 = vmatpush.xpose.msra.mxu0 0.0
      %680 = vmatpush.xpose.msra.mxu0 0.0
      %681 = vmatpush.xpose.msra.mxu0 0.0
      %682 = vmatpush.xpose.msra.mxu0 %v665
      %683 = vmatmul.f32.gmra.mxu0 %v663
      %v684 = vpop.f32.mrf.mxu0
      %v685 = vadd.f32 0.0, %v684
      %686 = vdwg.mxu0
      %687 = vrot.lane.b32.xlu0 %v607, 96
      %v688 = vpop.permute.xlu0 %687
      %v689 = vsel %vm610, %v607, 0
      %v691 = vsel %vm610, %v688, 0
      %693 = vmatpush.xpose.msra.mxu0 0.0
      %694 = vmatpush.xpose.msra.mxu0 0.0
      %695 = vmatpush.xpose.msra.mxu0 0.0
      %696 = vmatpush.xpose.msra.mxu0 0.0
      %697 = vmatpush.xpose.msra.mxu0 0.0
      %698 = vmatpush.xpose.msra.mxu0 0.0
      %699 = vmatpush.xpose.msra.mxu0 0.0
      %700 = vmatpush.xpose.msra.mxu0 0.0
      %701 = vmatpush.xpose.msra.mxu0 0.0
      %702 = vmatpush.xpose.msra.mxu0 0.0
      %703 = vmatpush.xpose.msra.mxu0 0.0
      %704 = vmatpush.xpose.msra.mxu0 0.0
      %705 = vmatpush.xpose.msra.mxu0 0.0
      %706 = vmatpush.xpose.msra.mxu0 0.0
      %707 = vmatpush.xpose.msra.mxu0 0.0
      %708 = vmatpush.xpose.msra.mxu0 %v691
      %709 = vmatmul.f32.gmra.mxu0 %v689
      %v710 = vpop.f32.mrf.mxu0
      %v711 = vadd.f32 0.0, %v710
      %712 = vdwg.mxu0
      %v713 = vmul.f32 %v633, 0.17677669
      %v714 = vmul.f32 %v659, 0.17677669
      %v715 = vmul.f32 %v685, 0.17677669
      %v716 = vmul.f32 %v711, 0.17677669
      %v717 = vsel %vm523, 1, 0
      %vm718 = vcmp.eq.s32.totalorder %v717, 1
      %v719 = vsel %vm718, %v713, -1e+30
      %v720 = vsel %vm718, %v714, -1e+30
      %v721 = vsel %vm718, %v715, -1e+30
      %v722 = vsel %vm718, %v716, -1e+30
      %v723 = vsel %vm610, %v719, -inf
      %724 = vmax.xlane.f32.xlu0 %v723
      %v725 = vpop.xlane.xlu0 %724
      %v726 = vsel %vm610, %v720, -inf
      %727 = vmax.xlane.f32.xlu0 %v726
      %v728 = vpop.xlane.xlu0 %727
      %v729 = vsel %vm610, %v721, -inf
      %730 = vmax.xlane.f32.xlu0 %v729
      %v731 = vpop.xlane.xlu0 %730
      %v732 = vsel %vm610, %v722, -inf
      %733 = vmax.xlane.f32.xlu0 %v732
      %v734 = vpop.xlane.xlu0 %733
      %v735 = vsub.f32 %v719, %v725
      %v736 = vsub.f32 %v720, %v728
      %v737 = vsub.f32 %v721, %v731
      %v738 = vsub.f32 %v722, %v734
      %v739 = vmul.f32 %v735, 1.442695
      %v740 = vpow.pop %v739
      %v741 = vmul.f32 %v736, 1.442695
      %v742 = vpow.pop %v741
      %v743 = vmul.f32 %v737, 1.442695
      %v744 = vpow.pop %v743
      %v745 = vmul.f32 %v738, 1.442695
      %v746 = vpow.pop %v745
      %v747 = vsel %vm610, %v740, 0.0
      %748 = vadd.xlane.f32.xlu0 %v747
      %v749 = vpop.xlane.xlu0 %748
      %v750 = vsel %vm610, %v742, 0.0
      %751 = vadd.xlane.f32.xlu0 %v750
      %v752 = vpop.xlane.xlu0 %751
      %v753 = vsel %vm610, %v744, 0.0
      %754 = vadd.xlane.f32.xlu0 %v753
      %v755 = vpop.xlane.xlu0 %754
      %v756 = vsel %vm610, %v746, 0.0
      %757 = vadd.xlane.f32.xlu0 %v756
      %v758 = vpop.xlane.xlu0 %757
      %v759 = vrcp.pop %v749
      %v760 = vmul.f32 %v749, %v759
      %v761 = vsub.f32 1.0, %v760
      %v762 = vmul.f32 %v759, %v761
      %v763 = vadd.f32 %v759, %v762
      %vm764 = vweird.f32 %v749
      %vm765 = vweird.f32 %v759
      %vm766 = vmor %vm764, %vm765
      %v767 = vsel %vm766, %v759, %v763
      %v768 = vand.u32 2147483647, %v749
      %vm769 = vcmp.eq.f32.partialorder %v768, 8.507059e+37
      %v770 = vand.u32 %v749, 2147483648
      %v771 = vor.u32 1.1754944e-38, %v770
      %v772 = vsel %vm769, %v771, %v767
      %v773 = vmul.f32 %v740, %v772
      %v774 = vrcp.pop %v752
      %v775 = vmul.f32 %v752, %v774
      %v776 = vsub.f32 1.0, %v775
      %v777 = vmul.f32 %v774, %v776
      %v778 = vadd.f32 %v774, %v777
      %vm779 = vweird.f32 %v752
      %vm780 = vweird.f32 %v774
      %vm781 = vmor %vm779, %vm780
      %v782 = vsel %vm781, %v774, %v778
      %v783 = vand.u32 2147483647, %v752
      %vm784 = vcmp.eq.f32.partialorder %v783, 8.507059e+37
      %v785 = vand.u32 %v752, 2147483648
      %v786 = vor.u32 1.1754944e-38, %v785
      %v787 = vsel %vm784, %v786, %v782
      %v788 = vmul.f32 %v742, %v787
      %v789 = vrcp.pop %v755
      %v790 = vmul.f32 %v755, %v789
      %v791 = vsub.f32 1.0, %v790
      %v792 = vmul.f32 %v789, %v791
      %v793 = vadd.f32 %v789, %v792
      %vm794 = vweird.f32 %v755
      %vm795 = vweird.f32 %v789
      %vm796 = vmor %vm794, %vm795
      %v797 = vsel %vm796, %v789, %v793
      %v798 = vand.u32 2147483647, %v755
      %vm799 = vcmp.eq.f32.partialorder %v798, 8.507059e+37
      %v800 = vand.u32 %v755, 2147483648
      %v801 = vor.u32 1.1754944e-38, %v800
      %v802 = vsel %vm799, %v801, %v797
      %v803 = vmul.f32 %v744, %v802
      %v804 = vrcp.pop %v758
      %v805 = vmul.f32 %v758, %v804
      %v806 = vsub.f32 1.0, %v805
      %v807 = vmul.f32 %v804, %v806
      %v808 = vadd.f32 %v804, %v807
      %vm809 = vweird.f32 %v758
      %vm810 = vweird.f32 %v804
      %vm811 = vmor %vm809, %vm810
      %v812 = vsel %vm811, %v804, %v808
      %v813 = vand.u32 2147483647, %v758
      %vm814 = vcmp.eq.f32.partialorder %v813, 8.507059e+37
      %v815 = vand.u32 %v758, 2147483648
      %v816 = vor.u32 1.1754944e-38, %v815
      %v817 = vsel %vm814, %v816, %v812
      %v818 = vmul.f32 %v746, %v817
      %819 = vrot.lane.b32.xlu0 %v594, 64
      %v820 = vpop.permute.xlu0 %819
      %v823 = vsel %vm610, %v773, 0
      %825 = vmatpush.msra.mxu0 0.0
      %826 = vmatpush.msra.mxu0 0.0
      %827 = vmatpush.msra.mxu0 0.0
      %828 = vmatpush.msra.mxu0 0.0
      %829 = vmatpush.msra.mxu0 0.0
      %830 = vmatpush.msra.mxu0 0.0
      %831 = vmatpush.msra.mxu0 0.0
      %832 = vmatpush.msra.mxu0 0.0
      %833 = vmatpush.msra.mxu0 0.0
      %834 = vmatpush.msra.mxu0 0.0
      %835 = vmatpush.msra.mxu0 0.0
      %836 = vmatpush.msra.mxu0 0.0
      %837 = vmatpush.msra.mxu0 0.0
      %838 = vmatpush.msra.mxu0 0.0
      %839 = vmatpush.msra.mxu0 0.0
      %840 = vmatpush.msra.mxu0 %v820
      %841 = vmatmul.f32.gmra.mxu0 %v823
      %v842 = vpop.f32.mrf.mxu0
      %v843 = vadd.f32 0.0, %v842
      %844 = vdwg.mxu0
      %845 = vrot.lane.b32.xlu0 %v603, 64
      %v846 = vpop.permute.xlu0 %845
      %v849 = vsel %vm610, %v788, 0
      %851 = vmatpush.msra.mxu0 0.0
      %852 = vmatpush.msra.mxu0 0.0
      %853 = vmatpush.msra.mxu0 0.0
      %854 = vmatpush.msra.mxu0 0.0
      %855 = vmatpush.msra.mxu0 0.0
      %856 = vmatpush.msra.mxu0 0.0
      %857 = vmatpush.msra.mxu0 0.0
      %858 = vmatpush.msra.mxu0 0.0
      %859 = vmatpush.msra.mxu0 0.0
      %860 = vmatpush.msra.mxu0 0.0
      %861 = vmatpush.msra.mxu0 0.0
      %862 = vmatpush.msra.mxu0 0.0
      %863 = vmatpush.msra.mxu0 0.0
      %864 = vmatpush.msra.mxu0 0.0
      %865 = vmatpush.msra.mxu0 0.0
      %866 = vmatpush.msra.mxu0 %v846
      %867 = vmatmul.f32.gmra.mxu0 %v849
      %v868 = vpop.f32.mrf.mxu0
      %v869 = vadd.f32 0.0, %v868
      %870 = vdwg.mxu0
      %871 = vrot.lane.b32.xlu0 %v605, 64
      %v872 = vpop.permute.xlu0 %871
      %v875 = vsel %vm610, %v803, 0
      %877 = vmatpush.msra.mxu0 0.0
      %878 = vmatpush.msra.mxu0 0.0
      %879 = vmatpush.msra.mxu0 0.0
      %880 = vmatpush.msra.mxu0 0.0
      %881 = vmatpush.msra.mxu0 0.0
      %882 = vmatpush.msra.mxu0 0.0
      %883 = vmatpush.msra.mxu0 0.0
      %884 = vmatpush.msra.mxu0 0.0
      %885 = vmatpush.msra.mxu0 0.0
      %886 = vmatpush.msra.mxu0 0.0
      %887 = vmatpush.msra.mxu0 0.0
      %888 = vmatpush.msra.mxu0 0.0
      %889 = vmatpush.msra.mxu0 0.0
      %890 = vmatpush.msra.mxu0 0.0
      %891 = vmatpush.msra.mxu0 0.0
      %892 = vmatpush.msra.mxu0 %v872
      %893 = vmatmul.f32.gmra.mxu0 %v875
      %v894 = vpop.f32.mrf.mxu0
      %v895 = vadd.f32 0.0, %v894
      %896 = vdwg.mxu0
      %897 = vrot.lane.b32.xlu0 %v607, 64
      %v898 = vpop.permute.xlu0 %897
      %v901 = vsel %vm610, %v818, 0
      %903 = vmatpush.msra.mxu0 0.0
      %904 = vmatpush.msra.mxu0 0.0
      %905 = vmatpush.msra.mxu0 0.0
      %906 = vmatpush.msra.mxu0 0.0
      %907 = vmatpush.msra.mxu0 0.0
      %908 = vmatpush.msra.mxu0 0.0
      %909 = vmatpush.msra.mxu0 0.0
      %910 = vmatpush.msra.mxu0 0.0
      %911 = vmatpush.msra.mxu0 0.0
      %912 = vmatpush.msra.mxu0 0.0
      %913 = vmatpush.msra.mxu0 0.0
      %914 = vmatpush.msra.mxu0 0.0
      %915 = vmatpush.msra.mxu0 0.0
      %916 = vmatpush.msra.mxu0 0.0
      %917 = vmatpush.msra.mxu0 0.0
      %918 = vmatpush.msra.mxu0 %v898
      %919 = vmatmul.f32.gmra.mxu0 %v901
      %v920 = vpop.f32.mrf.mxu0
      %v921 = vadd.f32 0.0, %v920
      %922 = vdwg.mxu0
      %v923 = vpack.c.bf16 %v843, %v843
      %v924 = vpack.c.bf16 %v869, %v869
      %v925 = vpack.c.bf16 %v895, %v895
      %v926 = vpack.c.bf16 %v921, %v921
      %v928 = vsel %vm610, %v923, 0
      %vm930 = vcmask 1043456
      %v932 = vsel %vm930, %v597, 0
      %934 = vmatpush.bf16.msra.mxu0 0
      %935 = vmatpush.bf16.msra.mxu0 0
      %936 = vmatpush.bf16.msra.mxu0 0
      %937 = vmatpush.bf16.msra.mxu0 0
      %938 = vmatpush.bf16.msra.mxu0 0
      %939 = vmatpush.bf16.msra.mxu0 0
      %940 = vmatpush.bf16.msra.mxu0 0
      %941 = vmatpush.bf16.msra.mxu0 %v932
      %942 = vmatmul.bf16.gmra.mxu0 %v928
      %v943 = vpop.f32.mrf.mxu0
      %v944 = vadd.f32 0.0, %v943
      %v945 = vpop.f32.mrf.mxu0
      %946 = vdwg.mxu0
      %v948 = vsel %vm610, %v924, 0
      %v951 = vsel %vm930, %v598, 0
      %953 = vmatpush.bf16.msra.mxu0 0
      %954 = vmatpush.bf16.msra.mxu0 0
      %955 = vmatpush.bf16.msra.mxu0 0
      %956 = vmatpush.bf16.msra.mxu0 0
      %957 = vmatpush.bf16.msra.mxu0 0
      %958 = vmatpush.bf16.msra.mxu0 0
      %959 = vmatpush.bf16.msra.mxu0 0
      %960 = vmatpush.bf16.msra.mxu0 %v951
      %961 = vmatmul.bf16.gmra.mxu0 %v948
      %v962 = vpop.f32.mrf.mxu0
      %v963 = vadd.f32 0.0, %v962
      %v964 = vpop.f32.mrf.mxu0
      %965 = vdwg.mxu0
      %v967 = vsel %vm610, %v925, 0
      %v970 = vsel %vm930, %v599, 0
      %972 = vmatpush.bf16.msra.mxu0 0
      %973 = vmatpush.bf16.msra.mxu0 0
      %974 = vmatpush.bf16.msra.mxu0 0
      %975 = vmatpush.bf16.msra.mxu0 0
      %976 = vmatpush.bf16.msra.mxu0 0
      %977 = vmatpush.bf16.msra.mxu0 0
      %978 = vmatpush.bf16.msra.mxu0 0
      %979 = vmatpush.bf16.msra.mxu0 %v970
      %980 = vmatmul.bf16.gmra.mxu0 %v967
      %v981 = vpop.f32.mrf.mxu0
      %v982 = vadd.f32 0.0, %v981
      %v983 = vpop.f32.mrf.mxu0
      %984 = vdwg.mxu0
      %v986 = vsel %vm610, %v926, 0
      %v989 = vsel %vm930, %v600, 0
      %991 = vmatpush.bf16.msra.mxu0 0
      %992 = vmatpush.bf16.msra.mxu0 0
      %993 = vmatpush.bf16.msra.mxu0 0
      %994 = vmatpush.bf16.msra.mxu0 0
      %995 = vmatpush.bf16.msra.mxu0 0
      %996 = vmatpush.bf16.msra.mxu0 0
      %997 = vmatpush.bf16.msra.mxu0 0
      %998 = vmatpush.bf16.msra.mxu0 %v989
      %999 = vmatmul.bf16.gmra.mxu0 %v986
      %v1000 = vpop.f32.mrf.mxu0
      %v1001 = vadd.f32 0.0, %v1000
      %v1002 = vpop.f32.mrf.mxu0
      %1003 = vdwg.mxu0
      %v1004 = vsel %vm526, %v944, 0.0
      %v1005 = vsel %vm526, %v963, 0.0
      %v1006 = vadd.f32 %v1004, %v1005
      %v1007 = vsel %vm526, %v982, 0.0
      %v1008 = vadd.f32 %v1006, %v1007
      %v1009 = vsel %vm526, %v1001, 0.0
      %v1010 = vadd.f32 %v1008, %v1009
      %v1011 = vadd.f32 %v518, %v1010
      %v1012 = vld [vmem:[%s5] sm:$0x1]
      %v1014 = vperm.slane %v1012, 0
      %v1016 = vadd.f32 %v1011, %v1014
      %v1017 = vld [vmem:[%s6] sm:$0x1]
      %v1018 = vld [vmem:[%s7] sm:$0x1]
      %v1019 = vsel %vm526, %v1016, 0.0
      %1020 = vadd.xlane.f32.xlu0 %v1019
      %v1021 = vpop.xlane.xlu0 %1020
      %v1022 = vmul.f32 %v1021, %v536
      %v1023 = vsub.f32 %v1016, %v1022
      %v1024 = vmul.f32 %v1023, %v1023
      %v1025 = vsel %vm526, %v1024, 0.0
      %1026 = vadd.xlane.f32.xlu0 %v1025
      %v1027 = vpop.xlane.xlu0 %1026
      %v1028 = vmul.f32 %v1027, %v536
      %v1029 = vadd.f32 %v1028, 1e-05
      %v1030 = vrsqrt.pop %v1029
      %v1031 = vmul.f32 %v1030, %v1029
      %v1032 = vmul.f32 %v1031, %v1030
      %v1033 = vmul.f32 0.5, %v1032
      %v1034 = vsub.f32 1.5, %v1033
      %v1035 = vmul.f32 %v1030, %v1034
      %vm1036 = vweird.f32 %v1029
      %vm1037 = vweird.f32 %v1030
      %vm1038 = vmor %vm1036, %vm1037
      %v1039 = vsel %vm1038, %v1030, %v1035
      %v1040 = vmul.f32 %v1023, %v1039
      %v1042 = vperm.slane %v1017, 0
      %v1044 = vmul.f32 %v1040, %v1042
      %v1046 = vperm.slane %v1018, 0
      %v1048 = vadd.f32 %v1044, %v1046
      %v1049 = vpack.c.bf16 %v1048, %v1048
      %v1050 = vld [vmem:[%s8] sm:$0xf]
      %v1051 = vld [vmem:[%s8 + $0x4] sm:$0xf]
      %v1052 = vld [vmem:[%s8 + $0x8] sm:$0xf]
      %v1053 = vld [vmem:[%s8 + $0xc] sm:$0xf]
      %v1054 = vld [vmem:[%s9] sm:$0x1]
      %v1056 = vperm.slane %v1054, 0
      %v1062 = vunpack.c.l.b16 %v1050
      %v1063 = vunpack.c.l.b16 %v1051
      %v1064 = vunpack.c.l.b16 %v1052
      %v1065 = vunpack.c.l.b16 %v1053
      %v1066 = vpack.c.b16 %v1063, %v1062
      %v1067 = vpack.c.b16 %v1065, %v1064
      %v1071 = vsel %vm526, %v1049, 0
      %1073 = vmatpush.bf16.msra.mxu0 0
      %1074 = vmatpush.bf16.msra.mxu0 0
      %1075 = vmatpush.bf16.msra.mxu0 0
      %1076 = vmatpush.bf16.msra.mxu0 0
      %1077 = vmatpush.bf16.msra.mxu0 0
      %1078 = vmatpush.bf16.msra.mxu0 0
      %1079 = vmatpush.bf16.msra.mxu0 %v1067
      %1080 = vmatpush.bf16.msra.mxu0 %v1066
      %1081 = vmatmul.bf16.gmra.mxu0 %v1071
      %v1082 = vpop.f32.mrf.mxu0
      %v1083 = vadd.f32 %v1056, %v1082
      %v1084 = vpop.f32.mrf.mxu0
      %1085 = vdwg.mxu0
      %v1086 = vmax.f32 %v1083, 0.0
      %v1087 = vpack.c.bf16 %v1086, %v1086
      %v1088 = vld [vmem:[%s10] sm:$0xf]
      %v1089 = vld [vmem:[%s10 + $0x4] sm:$0xf]
      %v1090 = vld [vmem:[%s10 + $0x8] sm:$0xf]
      %v1091 = vld [vmem:[%s10 + $0xc] sm:$0xf]
      %v1092 = vld [vmem:[%s10 + $0x10] sm:$0xf]
      %v1093 = vld [vmem:[%s10 + $0x14] sm:$0xf]
      %v1094 = vld [vmem:[%s10 + $0x18] sm:$0xf]
      %v1095 = vld [vmem:[%s10 + $0x1c] sm:$0xf]
      %v1096 = vld [vmem:[%s10 + $0x20] sm:$0xf]
      %v1097 = vld [vmem:[%s10 + $0x24] sm:$0xf]
      %v1098 = vld [vmem:[%s10 + $0x28] sm:$0xf]
      %v1099 = vld [vmem:[%s10 + $0x2c] sm:$0xf]
      %v1100 = vld [vmem:[%s10 + $0x30] sm:$0xf]
      %v1101 = vld [vmem:[%s10 + $0x34] sm:$0xf]
      %v1102 = vld [vmem:[%s10 + $0x38] sm:$0xf]
      %v1103 = vld [vmem:[%s10 + $0x3c] sm:$0xf]
      %v1120 = vunpack.c.l.b16 %v1088
      %v1121 = vunpack.c.l.b16 %v1089
      %v1122 = vunpack.c.l.b16 %v1090
      %v1123 = vunpack.c.l.b16 %v1091
      %v1124 = vunpack.c.l.b16 %v1092
      %v1125 = vunpack.c.l.b16 %v1093
      %v1126 = vunpack.c.l.b16 %v1094
      %v1127 = vunpack.c.l.b16 %v1095
      %v1128 = vunpack.c.l.b16 %v1096
      %v1129 = vunpack.c.l.b16 %v1097
      %v1130 = vunpack.c.l.b16 %v1098
      %v1131 = vunpack.c.l.b16 %v1099
      %v1132 = vunpack.c.l.b16 %v1100
      %v1133 = vunpack.c.l.b16 %v1101
      %v1134 = vunpack.c.l.b16 %v1102
      %v1135 = vunpack.c.l.b16 %v1103
      %v1136 = vpack.c.b16 %v1121, %v1120
      %v1137 = vpack.c.b16 %v1123, %v1122
      %v1138 = vpack.c.b16 %v1125, %v1124
      %v1139 = vpack.c.b16 %v1127, %v1126
      %v1140 = vpack.c.b16 %v1129, %v1128
      %v1141 = vpack.c.b16 %v1131, %v1130
      %v1142 = vpack.c.b16 %v1133, %v1132
      %v1143 = vpack.c.b16 %v1135, %v1134
      %1152 = vmatpush.bf16.msra.mxu0 %v1143
      %1153 = vmatpush.bf16.msra.mxu0 %v1142
      %1154 = vmatpush.bf16.msra.mxu0 %v1141
      %1155 = vmatpush.bf16.msra.mxu0 %v1140
      %1156 = vmatpush.bf16.msra.mxu0 %v1139
      %1157 = vmatpush.bf16.msra.mxu0 %v1138
      %1158 = vmatpush.bf16.msra.mxu0 %v1137
      %1159 = vmatpush.bf16.msra.mxu0 %v1136
      %1160 = vmatmul.bf16.gmra.mxu0 %v1087
      %v1161 = vpop.f32.mrf.mxu0
      %v1162 = vadd.f32 0.0, %v1161
      %v1163 = vpop.f32.mrf.mxu0
      %1164 = vdwg.mxu0
      %v1165 = vadd.f32 %v1016, %v1162
      %v1166 = vld [vmem:[%s11] sm:$0x1]
      %v1168 = vperm.slane %v1166, 0
      %v1170 = vadd.f32 %v1165, %v1168
      %s1171 = scalar_lea.vmem %s1, 1
      %v1172 = vld [vmem:[%s1171] sm:$0x1]
      %s1173 = scalar_lea.vmem %s2, 1
      %v1174 = vld [vmem:[%s1173] sm:$0x1]
      %v1175 = vsel %vm526, %v1170, 0.0
      %1176 = vadd.xlane.f32.xlu0 %v1175
      %v1177 = vpop.xlane.xlu0 %1176
      %v1178 = vmul.f32 %v1177, %v536
      %v1179 = vsub.f32 %v1170, %v1178
      %v1180 = vmul.f32 %v1179, %v1179
      %v1181 = vsel %vm526, %v1180, 0.0
      %1182 = vadd.xlane.f32.xlu0 %v1181
      %v1183 = vpop.xlane.xlu0 %1182
      %v1184 = vmul.f32 %v1183, %v536
      %v1185 = vadd.f32 %v1184, 1e-05
      %v1186 = vrsqrt.pop %v1185
      %v1187 = vmul.f32 %v1186, %v1185
      %v1188 = vmul.f32 %v1187, %v1186
      %v1189 = vmul.f32 0.5, %v1188
      %v1190 = vsub.f32 1.5, %v1189
      %v1191 = vmul.f32 %v1186, %v1190
      %vm1192 = vweird.f32 %v1185
      %vm1193 = vweird.f32 %v1186
      %vm1194 = vmor %vm1192, %vm1193
      %v1195 = vsel %vm1194, %v1186, %v1191
      %v1196 = vmul.f32 %v1179, %v1195
      %v1198 = vperm.slane %v1172, 0
      %v1200 = vmul.f32 %v1196, %v1198
      %v1202 = vperm.slane %v1174, 0
      %v1204 = vadd.f32 %v1200, %v1202
      %v1205 = vpack.c.bf16 %v1204, %v1204
      %s1206 = scalar_lea.vmem %s3, 16
      %v1207 = vld [vmem:[%s1206] sm:$0xf]
      %v1208 = vld [vmem:[%s1206 + $0x4] sm:$0xf]
      %v1209 = vld [vmem:[%s1206 + $0x8] sm:$0xf]
      %v1210 = vld [vmem:[%s1206 + $0xc] sm:$0xf]
      %v1215 = vunpack.c.l.b16 %v1207
      %v1216 = vunpack.c.l.b16 %v1208
      %v1217 = vunpack.c.l.b16 %v1209
      %v1218 = vunpack.c.l.b16 %v1210
      %v1219 = vpack.c.b16 %v1216, %v1215
      %v1220 = vpack.c.b16 %v1218, %v1217
      %v1224 = vsel %vm526, %v1205, 0
      %1226 = vmatpush.bf16.msra.mxu0 0
      %1227 = vmatpush.bf16.msra.mxu0 0
      %1228 = vmatpush.bf16.msra.mxu0 0
      %1229 = vmatpush.bf16.msra.mxu0 0
      %1230 = vmatpush.bf16.msra.mxu0 0
      %1231 = vmatpush.bf16.msra.mxu0 0
      %1232 = vmatpush.bf16.msra.mxu0 %v1220
      %1233 = vmatpush.bf16.msra.mxu0 %v1219
      %1234 = vmatmul.bf16.gmra.mxu0 %v1224
      %v1235 = vpop.f32.mrf.mxu0
      %v1236 = vadd.f32 0.0, %v1235
      %v1237 = vpop.f32.mrf.mxu0
      %1238 = vdwg.mxu0
      %s1239 = scalar_lea.vmem %s4, 16
      %v1240 = vld [vmem:[%s1239] sm:$0xf]
      %v1241 = vld [vmem:[%s1239 + $0x4] sm:$0xf]
      %v1242 = vld [vmem:[%s1239 + $0x8] sm:$0xf]
      %v1243 = vld [vmem:[%s1239 + $0xc] sm:$0xf]
      %1245 = vrot.lane.b32.xlu0 %v1236, 120
      %v1246 = vpop.permute.xlu0 %1245
      %1247 = vrot.lane.b32.xlu0 %v1236, 112
      %v1248 = vpop.permute.xlu0 %1247
      %1249 = vrot.lane.b32.xlu0 %v1236, 104
      %v1250 = vpop.permute.xlu0 %1249
      %1251 = vrot.lane.b32.xlu0 %v1236, 96
      %v1252 = vpop.permute.xlu0 %1251
      %v1253 = vsel %vm610, %v1236, 0
      %v1255 = vsel %vm610, %v1252, 0
      %1257 = vmatpush.xpose.msra.mxu0 0.0
      %1258 = vmatpush.xpose.msra.mxu0 0.0
      %1259 = vmatpush.xpose.msra.mxu0 0.0
      %1260 = vmatpush.xpose.msra.mxu0 0.0
      %1261 = vmatpush.xpose.msra.mxu0 0.0
      %1262 = vmatpush.xpose.msra.mxu0 0.0
      %1263 = vmatpush.xpose.msra.mxu0 0.0
      %1264 = vmatpush.xpose.msra.mxu0 0.0
      %1265 = vmatpush.xpose.msra.mxu0 0.0
      %1266 = vmatpush.xpose.msra.mxu0 0.0
      %1267 = vmatpush.xpose.msra.mxu0 0.0
      %1268 = vmatpush.xpose.msra.mxu0 0.0
      %1269 = vmatpush.xpose.msra.mxu0 0.0
      %1270 = vmatpush.xpose.msra.mxu0 0.0
      %1271 = vmatpush.xpose.msra.mxu0 0.0
      %1272 = vmatpush.xpose.msra.mxu0 %v1255
      %1273 = vmatmul.f32.gmra.mxu0 %v1253
      %v1274 = vpop.f32.mrf.mxu0
      %v1275 = vadd.f32 0.0, %v1274
      %1276 = vdwg.mxu0
      %1277 = vrot.lane.b32.xlu0 %v1246, 96
      %v1278 = vpop.permute.xlu0 %1277
      %v1279 = vsel %vm610, %v1246, 0
      %v1281 = vsel %vm610, %v1278, 0
      %1283 = vmatpush.xpose.msra.mxu0 0.0
      %1284 = vmatpush.xpose.msra.mxu0 0.0
      %1285 = vmatpush.xpose.msra.mxu0 0.0
      %1286 = vmatpush.xpose.msra.mxu0 0.0
      %1287 = vmatpush.xpose.msra.mxu0 0.0
      %1288 = vmatpush.xpose.msra.mxu0 0.0
      %1289 = vmatpush.xpose.msra.mxu0 0.0
      %1290 = vmatpush.xpose.msra.mxu0 0.0
      %1291 = vmatpush.xpose.msra.mxu0 0.0
      %1292 = vmatpush.xpose.msra.mxu0 0.0
      %1293 = vmatpush.xpose.msra.mxu0 0.0
      %1294 = vmatpush.xpose.msra.mxu0 0.0
      %1295 = vmatpush.xpose.msra.mxu0 0.0
      %1296 = vmatpush.xpose.msra.mxu0 0.0
      %1297 = vmatpush.xpose.msra.mxu0 0.0
      %1298 = vmatpush.xpose.msra.mxu0 %v1281
      %1299 = vmatmul.f32.gmra.mxu0 %v1279
      %v1300 = vpop.f32.mrf.mxu0
      %v1301 = vadd.f32 0.0, %v1300
      %1302 = vdwg.mxu0
      %1303 = vrot.lane.b32.xlu0 %v1248, 96
      %v1304 = vpop.permute.xlu0 %1303
      %v1305 = vsel %vm610, %v1248, 0
      %v1307 = vsel %vm610, %v1304, 0
      %1309 = vmatpush.xpose.msra.mxu0 0.0
      %1310 = vmatpush.xpose.msra.mxu0 0.0
      %1311 = vmatpush.xpose.msra.mxu0 0.0
      %1312 = vmatpush.xpose.msra.mxu0 0.0
      %1313 = vmatpush.xpose.msra.mxu0 0.0
      %1314 = vmatpush.xpose.msra.mxu0 0.0
      %1315 = vmatpush.xpose.msra.mxu0 0.0
      %1316 = vmatpush.xpose.msra.mxu0 0.0
      %1317 = vmatpush.xpose.msra.mxu0 0.0
      %1318 = vmatpush.xpose.msra.mxu0 0.0
      %1319 = vmatpush.xpose.msra.mxu0 0.0
      %1320 = vmatpush.xpose.msra.mxu0 0.0
      %1321 = vmatpush.xpose.msra.mxu0 0.0
      %1322 = vmatpush.xpose.msra.mxu0 0.0
      %1323 = vmatpush.xpose.msra.mxu0 0.0
      %1324 = vmatpush.xpose.msra.mxu0 %v1307
      %1325 = vmatmul.f32.gmra.mxu0 %v1305
      %v1326 = vpop.f32.mrf.mxu0
      %v1327 = vadd.f32 0.0, %v1326
      %1328 = vdwg.mxu0
      %1329 = vrot.lane.b32.xlu0 %v1250, 96
      %v1330 = vpop.permute.xlu0 %1329
      %v1331 = vsel %vm610, %v1250, 0
      %v1333 = vsel %vm610, %v1330, 0
      %1335 = vmatpush.xpose.msra.mxu0 0.0
      %1336 = vmatpush.xpose.msra.mxu0 0.0
      %1337 = vmatpush.xpose.msra.mxu0 0.0
      %1338 = vmatpush.xpose.msra.mxu0 0.0
      %1339 = vmatpush.xpose.msra.mxu0 0.0
      %1340 = vmatpush.xpose.msra.mxu0 0.0
      %1341 = vmatpush.xpose.msra.mxu0 0.0
      %1342 = vmatpush.xpose.msra.mxu0 0.0
      %1343 = vmatpush.xpose.msra.mxu0 0.0
      %1344 = vmatpush.xpose.msra.mxu0 0.0
      %1345 = vmatpush.xpose.msra.mxu0 0.0
      %1346 = vmatpush.xpose.msra.mxu0 0.0
      %1347 = vmatpush.xpose.msra.mxu0 0.0
      %1348 = vmatpush.xpose.msra.mxu0 0.0
      %1349 = vmatpush.xpose.msra.mxu0 0.0
      %1350 = vmatpush.xpose.msra.mxu0 %v1333
      %1351 = vmatmul.f32.gmra.mxu0 %v1331
      %v1352 = vpop.f32.mrf.mxu0
      %v1353 = vadd.f32 0.0, %v1352
      %1354 = vdwg.mxu0
      %v1355 = vmul.f32 %v1275, 0.17677669
      %v1356 = vmul.f32 %v1301, 0.17677669
      %v1357 = vmul.f32 %v1327, 0.17677669
      %v1358 = vmul.f32 %v1353, 0.17677669
      %v1359 = vsel %vm718, %v1355, -1e+30
      %v1360 = vsel %vm718, %v1356, -1e+30
      %v1361 = vsel %vm718, %v1357, -1e+30
      %v1362 = vsel %vm718, %v1358, -1e+30
      %v1363 = vsel %vm610, %v1359, -inf
      %1364 = vmax.xlane.f32.xlu0 %v1363
      %v1365 = vpop.xlane.xlu0 %1364
      %v1366 = vsel %vm610, %v1360, -inf
      %1367 = vmax.xlane.f32.xlu0 %v1366
      %v1368 = vpop.xlane.xlu0 %1367
      %v1369 = vsel %vm610, %v1361, -inf
      %1370 = vmax.xlane.f32.xlu0 %v1369
      %v1371 = vpop.xlane.xlu0 %1370
      %v1372 = vsel %vm610, %v1362, -inf
      %1373 = vmax.xlane.f32.xlu0 %v1372
      %v1374 = vpop.xlane.xlu0 %1373
      %v1375 = vsub.f32 %v1359, %v1365
      %v1376 = vsub.f32 %v1360, %v1368
      %v1377 = vsub.f32 %v1361, %v1371
      %v1378 = vsub.f32 %v1362, %v1374
      %v1379 = vmul.f32 %v1375, 1.442695
      %v1380 = vpow.pop %v1379
      %v1381 = vmul.f32 %v1376, 1.442695
      %v1382 = vpow.pop %v1381
      %v1383 = vmul.f32 %v1377, 1.442695
      %v1384 = vpow.pop %v1383
      %v1385 = vmul.f32 %v1378, 1.442695
      %v1386 = vpow.pop %v1385
      %v1387 = vsel %vm610, %v1380, 0.0
      %1388 = vadd.xlane.f32.xlu0 %v1387
      %v1389 = vpop.xlane.xlu0 %1388
      %v1390 = vsel %vm610, %v1382, 0.0
      %1391 = vadd.xlane.f32.xlu0 %v1390
      %v1392 = vpop.xlane.xlu0 %1391
      %v1393 = vsel %vm610, %v1384, 0.0
      %1394 = vadd.xlane.f32.xlu0 %v1393
      %v1395 = vpop.xlane.xlu0 %1394
      %v1396 = vsel %vm610, %v1386, 0.0
      %1397 = vadd.xlane.f32.xlu0 %v1396
      %v1398 = vpop.xlane.xlu0 %1397
      %v1399 = vrcp.pop %v1389
      %v1400 = vmul.f32 %v1389, %v1399
      %v1401 = vsub.f32 1.0, %v1400
      %v1402 = vmul.f32 %v1399, %v1401
      %v1403 = vadd.f32 %v1399, %v1402
      %vm1404 = vweird.f32 %v1389
      %vm1405 = vweird.f32 %v1399
      %vm1406 = vmor %vm1404, %vm1405
      %v1407 = vsel %vm1406, %v1399, %v1403
      %v1408 = vand.u32 2147483647, %v1389
      %vm1409 = vcmp.eq.f32.partialorder %v1408, 8.507059e+37
      %v1410 = vand.u32 %v1389, 2147483648
      %v1411 = vor.u32 1.1754944e-38, %v1410
      %v1412 = vsel %vm1409, %v1411, %v1407
      %v1413 = vmul.f32 %v1380, %v1412
      %v1414 = vrcp.pop %v1392
      %v1415 = vmul.f32 %v1392, %v1414
      %v1416 = vsub.f32 1.0, %v1415
      %v1417 = vmul.f32 %v1414, %v1416
      %v1418 = vadd.f32 %v1414, %v1417
      %vm1419 = vweird.f32 %v1392
      %vm1420 = vweird.f32 %v1414
      %vm1421 = vmor %vm1419, %vm1420
      %v1422 = vsel %vm1421, %v1414, %v1418
      %v1423 = vand.u32 2147483647, %v1392
      %vm1424 = vcmp.eq.f32.partialorder %v1423, 8.507059e+37
      %v1425 = vand.u32 %v1392, 2147483648
      %v1426 = vor.u32 1.1754944e-38, %v1425
      %v1427 = vsel %vm1424, %v1426, %v1422
      %v1428 = vmul.f32 %v1382, %v1427
      %v1429 = vrcp.pop %v1395
      %v1430 = vmul.f32 %v1395, %v1429
      %v1431 = vsub.f32 1.0, %v1430
      %v1432 = vmul.f32 %v1429, %v1431
      %v1433 = vadd.f32 %v1429, %v1432
      %vm1434 = vweird.f32 %v1395
      %vm1435 = vweird.f32 %v1429
      %vm1436 = vmor %vm1434, %vm1435
      %v1437 = vsel %vm1436, %v1429, %v1433
      %v1438 = vand.u32 2147483647, %v1395
      %vm1439 = vcmp.eq.f32.partialorder %v1438, 8.507059e+37
      %v1440 = vand.u32 %v1395, 2147483648
      %v1441 = vor.u32 1.1754944e-38, %v1440
      %v1442 = vsel %vm1439, %v1441, %v1437
      %v1443 = vmul.f32 %v1384, %v1442
      %v1444 = vrcp.pop %v1398
      %v1445 = vmul.f32 %v1398, %v1444
      %v1446 = vsub.f32 1.0, %v1445
      %v1447 = vmul.f32 %v1444, %v1446
      %v1448 = vadd.f32 %v1444, %v1447
      %vm1449 = vweird.f32 %v1398
      %vm1450 = vweird.f32 %v1444
      %vm1451 = vmor %vm1449, %vm1450
      %v1452 = vsel %vm1451, %v1444, %v1448
      %v1453 = vand.u32 2147483647, %v1398
      %vm1454 = vcmp.eq.f32.partialorder %v1453, 8.507059e+37
      %v1455 = vand.u32 %v1398, 2147483648
      %v1456 = vor.u32 1.1754944e-38, %v1455
      %v1457 = vsel %vm1454, %v1456, %v1452
      %v1458 = vmul.f32 %v1386, %v1457
      %1459 = vrot.lane.b32.xlu0 %v1236, 64
      %v1460 = vpop.permute.xlu0 %1459
      %v1463 = vsel %vm610, %v1413, 0
      %1465 = vmatpush.msra.mxu0 0.0
      %1466 = vmatpush.msra.mxu0 0.0
      %1467 = vmatpush.msra.mxu0 0.0
      %1468 = vmatpush.msra.mxu0 0.0
      %1469 = vmatpush.msra.mxu0 0.0
      %1470 = vmatpush.msra.mxu0 0.0
      %1471 = vmatpush.msra.mxu0 0.0
      %1472 = vmatpush.msra.mxu0 0.0
      %1473 = vmatpush.msra.mxu0 0.0
      %1474 = vmatpush.msra.mxu0 0.0
      %1475 = vmatpush.msra.mxu0 0.0
      %1476 = vmatpush.msra.mxu0 0.0
      %1477 = vmatpush.msra.mxu0 0.0
      %1478 = vmatpush.msra.mxu0 0.0
      %1479 = vmatpush.msra.mxu0 0.0
      %1480 = vmatpush.msra.mxu0 %v1460
      %1481 = vmatmul.f32.gmra.mxu0 %v1463
      %v1482 = vpop.f32.mrf.mxu0
      %v1483 = vadd.f32 0.0, %v1482
      %1484 = vdwg.mxu0
      %1485 = vrot.lane.b32.xlu0 %v1246, 64
      %v1486 = vpop.permute.xlu0 %1485
      %v1489 = vsel %vm610, %v1428, 0
      %1491 = vmatpush.msra.mxu0 0.0
      %1492 = vmatpush.msra.mxu0 0.0
      %1493 = vmatpush.msra.mxu0 0.0
      %1494 = vmatpush.msra.mxu0 0.0
      %1495 = vmatpush.msra.mxu0 0.0
      %1496 = vmatpush.msra.mxu0 0.0
      %1497 = vmatpush.msra.mxu0 0.0
      %1498 = vmatpush.msra.mxu0 0.0
      %1499 = vmatpush.msra.mxu0 0.0
      %1500 = vmatpush.msra.mxu0 0.0
      %1501 = vmatpush.msra.mxu0 0.0
      %1502 = vmatpush.msra.mxu0 0.0
      %1503 = vmatpush.msra.mxu0 0.0
      %1504 = vmatpush.msra.mxu0 0.0
      %1505 = vmatpush.msra.mxu0 0.0
      %1506 = vmatpush.msra.mxu0 %v1486
      %1507 = vmatmul.f32.gmra.mxu0 %v1489
      %v1508 = vpop.f32.mrf.mxu0
      %v1509 = vadd.f32 0.0, %v1508
      %1510 = vdwg.mxu0
      %1511 = vrot.lane.b32.xlu0 %v1248, 64
      %v1512 = vpop.permute.xlu0 %1511
      %v1515 = vsel %vm610, %v1443, 0
      %1517 = vmatpush.msra.mxu0 0.0
      %1518 = vmatpush.msra.mxu0 0.0
      %1519 = vmatpush.msra.mxu0 0.0
      %1520 = vmatpush.msra.mxu0 0.0
      %1521 = vmatpush.msra.mxu0 0.0
      %1522 = vmatpush.msra.mxu0 0.0
      %1523 = vmatpush.msra.mxu0 0.0
      %1524 = vmatpush.msra.mxu0 0.0
      %1525 = vmatpush.msra.mxu0 0.0
      %1526 = vmatpush.msra.mxu0 0.0
      %1527 = vmatpush.msra.mxu0 0.0
      %1528 = vmatpush.msra.mxu0 0.0
      %1529 = vmatpush.msra.mxu0 0.0
      %1530 = vmatpush.msra.mxu0 0.0
      %1531 = vmatpush.msra.mxu0 0.0
      %1532 = vmatpush.msra.mxu0 %v1512
      %1533 = vmatmul.f32.gmra.mxu0 %v1515
      %v1534 = vpop.f32.mrf.mxu0
      %v1535 = vadd.f32 0.0, %v1534
      %1536 = vdwg.mxu0
      %1537 = vrot.lane.b32.xlu0 %v1250, 64
      %v1538 = vpop.permute.xlu0 %1537
      %v1541 = vsel %vm610, %v1458, 0
      %1543 = vmatpush.msra.mxu0 0.0
      %1544 = vmatpush.msra.mxu0 0.0
      %1545 = vmatpush.msra.mxu0 0.0
      %1546 = vmatpush.msra.mxu0 0.0
      %1547 = vmatpush.msra.mxu0 0.0
      %1548 = vmatpush.msra.mxu0 0.0
      %1549 = vmatpush.msra.mxu0 0.0
      %1550 = vmatpush.msra.mxu0 0.0
      %1551 = vmatpush.msra.mxu0 0.0
      %1552 = vmatpush.msra.mxu0 0.0
      %1553 = vmatpush.msra.mxu0 0.0
      %1554 = vmatpush.msra.mxu0 0.0
      %1555 = vmatpush.msra.mxu0 0.0
      %1556 = vmatpush.msra.mxu0 0.0
      %1557 = vmatpush.msra.mxu0 0.0
      %1558 = vmatpush.msra.mxu0 %v1538
      %1559 = vmatmul.f32.gmra.mxu0 %v1541
      %v1560 = vpop.f32.mrf.mxu0
      %v1561 = vadd.f32 0.0, %v1560
      %1562 = vdwg.mxu0
      %v1563 = vpack.c.bf16 %v1483, %v1483
      %v1564 = vpack.c.bf16 %v1509, %v1509
      %v1565 = vpack.c.bf16 %v1535, %v1535
      %v1566 = vpack.c.bf16 %v1561, %v1561
      %v1568 = vsel %vm610, %v1563, 0
      %v1571 = vsel %vm930, %v1240, 0
      %1573 = vmatpush.bf16.msra.mxu0 0
      %1574 = vmatpush.bf16.msra.mxu0 0
      %1575 = vmatpush.bf16.msra.mxu0 0
      %1576 = vmatpush.bf16.msra.mxu0 0
      %1577 = vmatpush.bf16.msra.mxu0 0
      %1578 = vmatpush.bf16.msra.mxu0 0
      %1579 = vmatpush.bf16.msra.mxu0 0
      %1580 = vmatpush.bf16.msra.mxu0 %v1571
      %1581 = vmatmul.bf16.gmra.mxu0 %v1568
      %v1582 = vpop.f32.mrf.mxu0
      %v1583 = vadd.f32 0.0, %v1582
      %v1584 = vpop.f32.mrf.mxu0
      %1585 = vdwg.mxu0
      %v1587 = vsel %vm610, %v1564, 0
      %v1590 = vsel %vm930, %v1241, 0
      %1592 = vmatpush.bf16.msra.mxu0 0
      %1593 = vmatpush.bf16.msra.mxu0 0
      %1594 = vmatpush.bf16.msra.mxu0 0
      %1595 = vmatpush.bf16.msra.mxu0 0
      %1596 = vmatpush.bf16.msra.mxu0 0
      %1597 = vmatpush.bf16.msra.mxu0 0
      %1598 = vmatpush.bf16.msra.mxu0 0
      %1599 = vmatpush.bf16.msra.mxu0 %v1590
      %1600 = vmatmul.bf16.gmra.mxu0 %v1587
      %v1601 = vpop.f32.mrf.mxu0
      %v1602 = vadd.f32 0.0, %v1601
      %v1603 = vpop.f32.mrf.mxu0
      %1604 = vdwg.mxu0
      %v1606 = vsel %vm610, %v1565, 0
      %v1609 = vsel %vm930, %v1242, 0
      %1611 = vmatpush.bf16.msra.mxu0 0
      %1612 = vmatpush.bf16.msra.mxu0 0
      %1613 = vmatpush.bf16.msra.mxu0 0
      %1614 = vmatpush.bf16.msra.mxu0 0
      %1615 = vmatpush.bf16.msra.mxu0 0
      %1616 = vmatpush.bf16.msra.mxu0 0
      %1617 = vmatpush.bf16.msra.mxu0 0
      %1618 = vmatpush.bf16.msra.mxu0 %v1609
      %1619 = vmatmul.bf16.gmra.mxu0 %v1606
      %v1620 = vpop.f32.mrf.mxu0
      %v1621 = vadd.f32 0.0, %v1620
      %v1622 = vpop.f32.mrf.mxu0
      %1623 = vdwg.mxu0
      %v1625 = vsel %vm610, %v1566, 0
      %v1628 = vsel %vm930, %v1243, 0
      %1630 = vmatpush.bf16.msra.mxu0 0
      %1631 = vmatpush.bf16.msra.mxu0 0
      %1632 = vmatpush.bf16.msra.mxu0 0
      %1633 = vmatpush.bf16.msra.mxu0 0
      %1634 = vmatpush.bf16.msra.mxu0 0
      %1635 = vmatpush.bf16.msra.mxu0 0
      %1636 = vmatpush.bf16.msra.mxu0 0
      %1637 = vmatpush.bf16.msra.mxu0 %v1628
      %1638 = vmatmul.bf16.gmra.mxu0 %v1625
      %v1639 = vpop.f32.mrf.mxu0
      %v1640 = vadd.f32 0.0, %v1639
      %v1641 = vpop.f32.mrf.mxu0
      %1642 = vdwg.mxu0
      %v1643 = vsel %vm526, %v1583, 0.0
      %v1644 = vsel %vm526, %v1602, 0.0
      %v1645 = vadd.f32 %v1643, %v1644
      %v1646 = vsel %vm526, %v1621, 0.0
      %v1647 = vadd.f32 %v1645, %v1646
      %v1648 = vsel %vm526, %v1640, 0.0
      %v1649 = vadd.f32 %v1647, %v1648
      %v1650 = vadd.f32 %v1170, %v1649
      %s1651 = scalar_lea.vmem %s5, 1
      %v1652 = vld [vmem:[%s1651] sm:$0x1]
      %v1654 = vperm.slane %v1652, 0
      %v1656 = vadd.f32 %v1650, %v1654
      %s1657 = scalar_lea.vmem %s6, 1
      %v1658 = vld [vmem:[%s1657] sm:$0x1]
      %s1659 = scalar_lea.vmem %s7, 1
      %v1660 = vld [vmem:[%s1659] sm:$0x1]
      %v1661 = vsel %vm526, %v1656, 0.0
      %1662 = vadd.xlane.f32.xlu0 %v1661
      %v1663 = vpop.xlane.xlu0 %1662
      %v1664 = vmul.f32 %v1663, %v536
      %v1665 = vsub.f32 %v1656, %v1664
      %v1666 = vmul.f32 %v1665, %v1665
      %v1667 = vsel %vm526, %v1666, 0.0
      %1668 = vadd.xlane.f32.xlu0 %v1667
      %v1669 = vpop.xlane.xlu0 %1668
      %v1670 = vmul.f32 %v1669, %v536
      %v1671 = vadd.f32 %v1670, 1e-05
      %v1672 = vrsqrt.pop %v1671
      %v1673 = vmul.f32 %v1672, %v1671
      %v1674 = vmul.f32 %v1673, %v1672
      %v1675 = vmul.f32 0.5, %v1674
      %v1676 = vsub.f32 1.5, %v1675
      %v1677 = vmul.f32 %v1672, %v1676
      %vm1678 = vweird.f32 %v1671
      %vm1679 = vweird.f32 %v1672
      %vm1680 = vmor %vm1678, %vm1679
      %v1681 = vsel %vm1680, %v1672, %v1677
      %v1682 = vmul.f32 %v1665, %v1681
      %v1684 = vperm.slane %v1658, 0
      %v1686 = vmul.f32 %v1682, %v1684
      %v1688 = vperm.slane %v1660, 0
      %v1690 = vadd.f32 %v1686, %v1688
      %v1691 = vpack.c.bf16 %v1690, %v1690
      %s1692 = scalar_lea.vmem %s8, 16
      %v1693 = vld [vmem:[%s1692] sm:$0xf]
      %v1694 = vld [vmem:[%s1692 + $0x4] sm:$0xf]
      %v1695 = vld [vmem:[%s1692 + $0x8] sm:$0xf]
      %v1696 = vld [vmem:[%s1692 + $0xc] sm:$0xf]
      %s1697 = scalar_lea.vmem %s9, 1
      %v1698 = vld [vmem:[%s1697] sm:$0x1]
      %v1700 = vperm.slane %v1698, 0
      %v1706 = vunpack.c.l.b16 %v1693
      %v1707 = vunpack.c.l.b16 %v1694
      %v1708 = vunpack.c.l.b16 %v1695
      %v1709 = vunpack.c.l.b16 %v1696
      %v1710 = vpack.c.b16 %v1707, %v1706
      %v1711 = vpack.c.b16 %v1709, %v1708
      %v1715 = vsel %vm526, %v1691, 0
      %1717 = vmatpush.bf16.msra.mxu0 0
      %1718 = vmatpush.bf16.msra.mxu0 0
      %1719 = vmatpush.bf16.msra.mxu0 0
      %1720 = vmatpush.bf16.msra.mxu0 0
      %1721 = vmatpush.bf16.msra.mxu0 0
      %1722 = vmatpush.bf16.msra.mxu0 0
      %1723 = vmatpush.bf16.msra.mxu0 %v1711
      %1724 = vmatpush.bf16.msra.mxu0 %v1710
      %1725 = vmatmul.bf16.gmra.mxu0 %v1715
      %v1726 = vpop.f32.mrf.mxu0
      %v1727 = vadd.f32 %v1700, %v1726
      %v1728 = vpop.f32.mrf.mxu0
      %1729 = vdwg.mxu0
      %v1730 = vmax.f32 %v1727, 0.0
      %v1731 = vpack.c.bf16 %v1730, %v1730
      %s1732 = scalar_lea.vmem %s10, 64
      %v1733 = vld [vmem:[%s1732] sm:$0xf]
      %v1734 = vld [vmem:[%s1732 + $0x4] sm:$0xf]
      %v1735 = vld [vmem:[%s1732 + $0x8] sm:$0xf]
      %v1736 = vld [vmem:[%s1732 + $0xc] sm:$0xf]
      %v1737 = vld [vmem:[%s1732 + $0x10] sm:$0xf]
      %v1738 = vld [vmem:[%s1732 + $0x14] sm:$0xf]
      %v1739 = vld [vmem:[%s1732 + $0x18] sm:$0xf]
      %v1740 = vld [vmem:[%s1732 + $0x1c] sm:$0xf]
      %v1741 = vld [vmem:[%s1732 + $0x20] sm:$0xf]
      %v1742 = vld [vmem:[%s1732 + $0x24] sm:$0xf]
      %v1743 = vld [vmem:[%s1732 + $0x28] sm:$0xf]
      %v1744 = vld [vmem:[%s1732 + $0x2c] sm:$0xf]
      %v1745 = vld [vmem:[%s1732 + $0x30] sm:$0xf]
      %v1746 = vld [vmem:[%s1732 + $0x34] sm:$0xf]
      %v1747 = vld [vmem:[%s1732 + $0x38] sm:$0xf]
      %v1748 = vld [vmem:[%s1732 + $0x3c] sm:$0xf]
      %v1765 = vunpack.c.l.b16 %v1733
      %v1766 = vunpack.c.l.b16 %v1734
      %v1767 = vunpack.c.l.b16 %v1735
      %v1768 = vunpack.c.l.b16 %v1736
      %v1769 = vunpack.c.l.b16 %v1737
      %v1770 = vunpack.c.l.b16 %v1738
      %v1771 = vunpack.c.l.b16 %v1739
      %v1772 = vunpack.c.l.b16 %v1740
      %v1773 = vunpack.c.l.b16 %v1741
      %v1774 = vunpack.c.l.b16 %v1742
      %v1775 = vunpack.c.l.b16 %v1743
      %v1776 = vunpack.c.l.b16 %v1744
      %v1777 = vunpack.c.l.b16 %v1745
      %v1778 = vunpack.c.l.b16 %v1746
      %v1779 = vunpack.c.l.b16 %v1747
      %v1780 = vunpack.c.l.b16 %v1748
      %v1781 = vpack.c.b16 %v1766, %v1765
      %v1782 = vpack.c.b16 %v1768, %v1767
      %v1783 = vpack.c.b16 %v1770, %v1769
      %v1784 = vpack.c.b16 %v1772, %v1771
      %v1785 = vpack.c.b16 %v1774, %v1773
      %v1786 = vpack.c.b16 %v1776, %v1775
      %v1787 = vpack.c.b16 %v1778, %v1777
      %v1788 = vpack.c.b16 %v1780, %v1779
      %1797 = vmatpush.bf16.msra.mxu0 %v1788
      %1798 = vmatpush.bf16.msra.mxu0 %v1787
      %1799 = vmatpush.bf16.msra.mxu0 %v1786
      %1800 = vmatpush.bf16.msra.mxu0 %v1785
      %1801 = vmatpush.bf16.msra.mxu0 %v1784
      %1802 = vmatpush.bf16.msra.mxu0 %v1783
      %1803 = vmatpush.bf16.msra.mxu0 %v1782
      %1804 = vmatpush.bf16.msra.mxu0 %v1781
      %1805 = vmatmul.bf16.gmra.mxu0 %v1731
      %v1806 = vpop.f32.mrf.mxu0
      %v1807 = vadd.f32 0.0, %v1806
      %v1808 = vpop.f32.mrf.mxu0
      %1809 = vdwg.mxu0
      %v1810 = vadd.f32 %v1656, %v1807
      %s1811 = scalar_lea.vmem %s11, 1
      %v1812 = vld [vmem:[%s1811] sm:$0x1]
      %v1814 = vperm.slane %v1812, 0
      %v1816 = vadd.f32 %v1810, %v1814
      %v1817 = vld [vmem:[%s12] sm:$0x1]
      %v1818 = vld [vmem:[%s13] sm:$0x1]
      %v1819 = vsel %vm526, %v1816, 0.0
      %1820 = vadd.xlane.f32.xlu0 %v1819
      %v1821 = vpop.xlane.xlu0 %1820
      %v1822 = vmul.f32 %v1821, %v536
      %v1823 = vsub.f32 %v1816, %v1822
      %v1824 = vmul.f32 %v1823, %v1823
      %v1825 = vsel %vm526, %v1824, 0.0
      %1826 = vadd.xlane.f32.xlu0 %v1825
      %v1827 = vpop.xlane.xlu0 %1826
      %v1828 = vmul.f32 %v1827, %v536
      %v1829 = vadd.f32 %v1828, 1e-05
      %v1830 = vrsqrt.pop %v1829
      %v1831 = vmul.f32 %v1830, %v1829
      %v1832 = vmul.f32 %v1831, %v1830
      %v1833 = vmul.f32 0.5, %v1832
      %v1834 = vsub.f32 1.5, %v1833
      %v1835 = vmul.f32 %v1830, %v1834
      %vm1836 = vweird.f32 %v1829
      %vm1837 = vweird.f32 %v1830
      %vm1838 = vmor %vm1836, %vm1837
      %v1839 = vsel %vm1838, %v1830, %v1835
      %v1840 = vmul.f32 %v1823, %v1839
      %v1842 = vperm.slane %v1817, 0
      %v1844 = vmul.f32 %v1840, %v1842
      %v1846 = vperm.slane %v1818, 0
      %v1848 = vadd.f32 %v1844, %v1846
      %v1849 = vpack.c.bf16 %v1848, %v1848
      %v1850 = vld [vmem:[%s14] sm:$0xf]
      %v1851 = vld [vmem:[%s14 + $0x4] sm:$0xf]
      %v1852 = vld [vmem:[%s14 + $0x8] sm:$0xf]
      %v1853 = vld [vmem:[%s14 + $0xc] sm:$0xf]
      %v1854 = vld [vmem:[%s15] sm:$0x1]
      %v1856 = vperm.slane %v1854, 0
      %v1862 = vunpack.c.l.b16 %v1850
      %v1863 = vunpack.c.l.b16 %v1851
      %v1864 = vunpack.c.l.b16 %v1852
      %v1865 = vunpack.c.l.b16 %v1853
      %v1866 = vpack.c.b16 %v1863, %v1862
      %v1867 = vpack.c.b16 %v1865, %v1864
      %v1871 = vsel %vm526, %v1849, 0
      %1873 = vmatpush.bf16.msra.mxu0 0
      %1874 = vmatpush.bf16.msra.mxu0 0
      %1875 = vmatpush.bf16.msra.mxu0 0
      %1876 = vmatpush.bf16.msra.mxu0 0
      %1877 = vmatpush.bf16.msra.mxu0 0
      %1878 = vmatpush.bf16.msra.mxu0 0
      %1879 = vmatpush.bf16.msra.mxu0 %v1867
      %1880 = vmatpush.bf16.msra.mxu0 %v1866
      %1881 = vmatmul.bf16.gmra.mxu0 %v1871
      %v1882 = vpop.f32.mrf.mxu0
      %v1883 = vadd.f32 %v1856, %v1882
      %v1884 = vpop.f32.mrf.mxu0
      %1885 = vdwg.mxu0
      %1886 = vst [vmem:[%s516] sm:$0xff] %v1883
      %p1887 = scmp.lt.s32.totalorder %s27, 1
      %s1888 = scalar_select %p1887, %s27, 1
      %s1889 = smul.addr %s1888, 8
      %s1890 = scalar_lea.vmem %s16, %s1889
      // Predicated region
      $region85: #{_lambda_.1} parent=83 // pred_check
        %p1891 = pneg %p386
      $region86: #{_lambda_.1} parent=83 // pred_check_branch
        %1893 = sbr.rel (%p1891) target = $region88
      $region87: #{_lambda_.1} parent=83 // pred_region
        _
      $region88: #{_lambda_.1} parent=83 // pred_fallthru
        _
    $region84: #{_lambda_.1} parent=5 // pred_fallthru
      _
    %p1894 = scmp.le.s32.totalorder 2, %s22
    // Predicated region
    $region89: #{_lambda_.1} parent=5 // pred_check
      %p1895 = pneg %p1894
    $region90: #{_lambda_.1} parent=5 // pred_check_branch
      %1897 = sbr.rel (%p1895) target = $region92
    $region91: #{_lambda_.1} parent=5 // pred_region
      %s1898 = ssub.s32 %s22, 2
      // Predicated region
      $region93: #{_lambda_.1} parent=91 // pred_check
        %p1899 = pneg %p392
      $region94: #{_lambda_.1} parent=91 // pred_check_branch
        %1901 = sbr.rel (%p1899) target = $region96
      $region95: #{_lambda_.1} parent=91 // pred_region
        %p1902 = scmp.lt.s32.totalorder %s28, 1
        %s1903 = scalar_select %p1902, %s28, 1
        %s1904 = smul.addr %s1903, 8
        %s1905 = scalar_lea.vmem %s16, %s1904
      $region96: #{_lambda_.1} parent=91 // pred_fallthru
        _
    $region92: #{_lambda_.1} parent=5 // pred_fallthru
      _
  $region6: #{_lambda_.1} parent=0 // loop_footer
    %s26 = sadd.s32 1, %s22
  $region7: #{_lambda_.1} parent=0 // loop_footer_branch
    %21 = sbr.rel target = $region3
  $region8: #{_lambda_.1} parent=0 // loop_exit
    _

</llo_original>
